<compile_context>
chip_gen: v6e
topology: v6e:2x2x1
jax: 0.10.0
libtpu: 0.0.40
codegen_flags: <defaults>
</compile_context>

<pallas_src>
import jax
import jax.numpy as jnp
from jax.experimental import pallas as pl
from jax.experimental.pallas import tpu as pltpu


def mlp_kernel(x_ref, w1_ref, b1_ref, w2_ref, b2_ref, w3_ref, b3_ref, o_ref):
    # In-kernel activation cast: x is read from HBM once as f32, cast to bf16
    # in VMEM for the MXU.
    x = x_ref[...].astype(jnp.bfloat16)
    # fc1 + ReLU : (bm, 512)bf16 @ (512, 512)bf16 -> f32 accumulate
    h1 = jnp.dot(x, w1_ref[...], preferred_element_type=jnp.float32)
    h1 = jnp.maximum(h1 + b1_ref[...], 0.0)
    # fc2 + ReLU : (bm, 512)bf16 @ (512, 128)bf16 -> f32 accumulate
    h2 = jnp.dot(h1.astype(jnp.bfloat16), w2_ref[...],
                 preferred_element_type=jnp.float32)
    h2 = jnp.maximum(h2 + b2_ref[...], 0.0)
    # fc3 : (bm, 128)bf16 @ (128, 2)bf16 -> f32; store the true 2 columns.
    out = jnp.dot(h2.astype(jnp.bfloat16), w3_ref[...],
                  preferred_element_type=jnp.float32)
    o_ref[...] = (out + b3_ref[...]).astype(o_ref.dtype)


def _pick_bm(B):
    """Row-tile size.

    - Small batches (< 16): single whole-batch step (nothing to split).
    - Otherwise: big tiles (up to 1024 rows) for HBM efficiency, capped at
      ceil(B/2) rounded up to a multiple of 8 so the parallel batch axis has
      at least 2 grid steps (lets Mosaic shard across v7x's 2 TensorCores;
      one extra ~0.35 us grid step is noise on v5e/v6e).
    """
    if B < 16:
        return B
    half = -(-B // 2)                 # ceil(B / 2)
    bm = ((half + 7) // 8) * 8        # round up to a multiple of 8
    return min(1024, bm)


def prepare_params(w1, b1, w2, b2, w3, b3):
    """One-time (init-time) weight prep: cast weights to bf16 for the MXU.

    Biases stay float32 (bias add / ReLU happen in f32 inside the kernel).
    Hoisted out of mlp_forward so the forward hot path is a single pallas_call.
    """
    return (w1.astype(jnp.bfloat16), b1,
            w2.astype(jnp.bfloat16), b2,
            w3.astype(jnp.bfloat16), b3)


def mlp_forward(x, w1_bf, b1, w2_bf, b2, w3_bf, b3, *, bm=None):
    B, D_in = x.shape
    D_h1 = w1_bf.shape[1]
    D_h2 = w2_bf.shape[1]
    D_out = w3_bf.shape[1]

    if bm is None:
        bm = _pick_bm(B)
    grid_m = pl.cdiv(B, bm)
    B_pad = grid_m * bm
    if B_pad != B:
        # Pad the last row tile (zeros); sliced off the output below.
        x = jnp.pad(x, ((0, B_pad - B), (0, 0)))

    # Weights/biases are small and grid-invariant: stay resident in VMEM.
    def full(arr):
        nd = arr.ndim
        return pl.BlockSpec(arr.shape, lambda i, _nd=nd: (0,) * _nd)

    flops = 2 * B_pad * (D_in * D_h1 + D_h1 * D_h2 + D_h2 * D_out)
    bytes_accessed = (
        B_pad * D_in * 4                                    # x (f32)
        + (w1_bf.size + w2_bf.size + w3_bf.size) * 2        # bf16 weights
        + (b1.size + b2.size + b3.size) * 4                 # f32 biases
        + B_pad * D_out * 4                                 # output (f32)
    )

    out = pl.pallas_call(
        mlp_kernel,
        out_shape=jax.ShapeDtypeStruct((B_pad, D_out), jnp.float32),
        grid_spec=pltpu.PrefetchScalarGridSpec(
            num_scalar_prefetch=0,
            grid=(grid_m,),
            in_specs=[
                pl.BlockSpec((bm, D_in), lambda i: (i, 0)),   # x row tile
                full(w1_bf), full(b1),
                full(w2_bf), full(b2),
                full(w3_bf), full(b3),
            ],
            # Direct (bm, 2) store: last dim equals the full array dim, legal;
            # masked vst cost hides under memory-bound slack.
            out_specs=pl.BlockSpec((bm, D_out), lambda i: (i, 0)),
        ),
        compiler_params=pltpu.CompilerParams(
            dimension_semantics=("parallel",),
        ),
        cost_estimate=pl.CostEstimate(
            flops=flops, transcendentals=0, bytes_accessed=bytes_accessed),
    )(x, w1_bf, b1, w2_bf, b2, w3_bf, b3)

    if B_pad != B:
        out = out[:B]
    return out


def init_params(key):
    """Deterministic init matching the PyTorch module's shapes.
    fc1: Linear(512, 512), fc2: Linear(512, 128), fc3: Linear(128, 2).
    Weights stored as (in, out); PyTorch-style U(-1/sqrt(fan_in), 1/sqrt(fan_in))."""
    ks = jax.random.split(key, 6)

    def uniform(k, shape, fan_in):
        bound = 1.0 / jnp.sqrt(fan_in)
        return jax.random.uniform(k, shape, jnp.float32, -bound, bound)

    w1 = uniform(ks[0], (512, 512), 512)
    b1 = uniform(ks[1], (1, 512), 512)
    w2 = uniform(ks[2], (512, 128), 512)
    b2 = uniform(ks[3], (1, 128), 512)
    w3 = uniform(ks[4], (128, 2), 128)
    b3 = uniform(ks[5], (1, 2), 128)
    return w1, b1, w2, b2, w3, b3


def reference_forward(x, w1, b1, w2, b2, w3, b3):
    h1 = jnp.maximum(x @ w1 + b1, 0.0)
    h2 = jnp.maximum(h1 @ w2 + b2, 0.0)
    return h2 @ w3 + b3


if __name__ == "__main__":
    key = jax.random.PRNGKey(0)
    k_x, k_p = jax.random.split(key)

    batch = 16
    x = jax.random.normal(k_x, (batch, 512), jnp.float32)
    params = init_params(k_p)
    params_prepped = prepare_params(*params)   # one-time weight bf16 cast

    fwd = jax.jit(mlp_forward)
    out = fwd(x, *params_prepped)
    out = jax.block_until_ready(out)

    ref = reference_forward(x, *params)
    assert out.shape == (batch, 2), out.shape
    # bf16 weights/activations on the MXU with f32 accumulation: allow small
    # mixed-precision drift vs the pure-f32 reference.
    assert jnp.allclose(out, ref, atol=2e-2, rtol=2e-2), "mismatch vs JAX reference"

    print("KERNEL_OK")
</pallas_src>

<mosaic_0001>
module attributes {stable_mosaic.version = 11 : i64} {
  func.func @mlp_kernel(%arg0: i32, %arg1: memref<8x512xf32, #tpu.memory_space<vmem>>, %arg2: memref<512x512xbf16, #tpu.memory_space<vmem>>, %arg3: memref<1x512xf32, #tpu.memory_space<vmem>>, %arg4: memref<512x128xbf16, #tpu.memory_space<vmem>>, %arg5: memref<1x128xf32, #tpu.memory_space<vmem>>, %arg6: memref<128x2xbf16, #tpu.memory_space<vmem>>, %arg7: memref<1x2xf32, #tpu.memory_space<vmem>>, %arg8: memref<8x2xf32, #tpu.memory_space<vmem>>) attributes {dimension_semantics = [#tpu.dimension_semantics<parallel>], iteration_bounds = array<i64: 2>, scalar_prefetch = 0 : i64, scratch_operands = 0 : i64, tpu.core_type = #tpu.core_type<tc>, window_params = [{transform_indices = @transform_0, window_bounds = array<i64: 8, 512>}, {pipeline_mode = #tpu.pipeline_mode<synchronous>, transform_indices = @transform_1, window_bounds = array<i64: 512, 512>}, {pipeline_mode = #tpu.pipeline_mode<synchronous>, transform_indices = @transform_2, window_bounds = array<i64: 1, 512>}, {pipeline_mode = #tpu.pipeline_mode<synchronous>, transform_indices = @transform_3, window_bounds = array<i64: 512, 128>}, {pipeline_mode = #tpu.pipeline_mode<synchronous>, transform_indices = @transform_4, window_bounds = array<i64: 1, 128>}, {pipeline_mode = #tpu.pipeline_mode<synchronous>, transform_indices = @transform_5, window_bounds = array<i64: 128, 2>}, {pipeline_mode = #tpu.pipeline_mode<synchronous>, transform_indices = @transform_6, window_bounds = array<i64: 1, 2>}, {transform_indices = @transform_7, window_bounds = array<i64: 8, 2>}]} {
    %c0 = arith.constant 0 : index
    %c0_0 = arith.constant 0 : index
    %0 = vector.load %arg1[%c0, %c0_0] : memref<8x512xf32, #tpu.memory_space<vmem>>, vector<8x512xf32>
    %1 = arith.truncf %0 : vector<8x512xf32> to vector<8x512xbf16>
    %c0_1 = arith.constant 0 : index
    %c0_2 = arith.constant 0 : index
    %2 = vector.load %arg2[%c0_1, %c0_2] : memref<512x512xbf16, #tpu.memory_space<vmem>>, vector<512x512xbf16>
    %cst = arith.constant dense<0.000000e+00> : vector<8x512xf32>
    %3 = tpu.matmul %1, %2, %cst {dimension_numbers = #tpu.dot_dimension_numbers<[1], [0], [0], [1], [0, 0, 1, 1], [], []>} : vector<8x512xbf16>, vector<512x512xbf16>, vector<8x512xf32> -> vector<8x512xf32>
    %c0_3 = arith.constant 0 : index
    %c0_4 = arith.constant 0 : index
    %4 = vector.load %arg3[%c0_3, %c0_4] : memref<1x512xf32, #tpu.memory_space<vmem>>, vector<1x512xf32>
    %5 = vector.broadcast %4 : vector<1x512xf32> to vector<8x512xf32>
    %6 = arith.addf %3, %5 : vector<8x512xf32>
    %cst_5 = arith.constant 0.000000e+00 : f32
    %7 = vector.broadcast %cst_5 : f32 to vector<8x512xf32>
    %8 = arith.maximumf %6, %7 : vector<8x512xf32>
    %9 = arith.truncf %8 : vector<8x512xf32> to vector<8x512xbf16>
    %c0_6 = arith.constant 0 : index
    %c0_7 = arith.constant 0 : index
    %10 = vector.load %arg4[%c0_6, %c0_7] : memref<512x128xbf16, #tpu.memory_space<vmem>>, vector<512x128xbf16>
    %cst_8 = arith.constant dense<0.000000e+00> : vector<8x128xf32>
    %11 = tpu.matmul %9, %10, %cst_8 {dimension_numbers = #tpu.dot_dimension_numbers<[1], [0], [0], [1], [0, 0, 1, 1], [], []>} : vector<8x512xbf16>, vector<512x128xbf16>, vector<8x128xf32> -> vector<8x128xf32>
    %c0_9 = arith.constant 0 : index
    %c0_10 = arith.constant 0 : index
    %12 = vector.load %arg5[%c0_9, %c0_10] : memref<1x128xf32, #tpu.memory_space<vmem>>, vector<1x128xf32>
    %13 = vector.broadcast %12 : vector<1x128xf32> to vector<8x128xf32>
    %14 = arith.addf %11, %13 : vector<8x128xf32>
    %cst_11 = arith.constant 0.000000e+00 : f32
    %15 = vector.broadcast %cst_11 : f32 to vector<8x128xf32>
    %16 = arith.maximumf %14, %15 : vector<8x128xf32>
    %17 = arith.truncf %16 : vector<8x128xf32> to vector<8x128xbf16>
    %c0_12 = arith.constant 0 : index
    %c0_13 = arith.constant 0 : index
    %18 = vector.load %arg6[%c0_12, %c0_13] : memref<128x2xbf16, #tpu.memory_space<vmem>>, vector<128x2xbf16>
    %cst_14 = arith.constant dense<0.000000e+00> : vector<8x2xf32>
    %19 = tpu.matmul %17, %18, %cst_14 {dimension_numbers = #tpu.dot_dimension_numbers<[1], [0], [0], [1], [0, 0, 1, 1], [], []>} : vector<8x128xbf16>, vector<128x2xbf16>, vector<8x2xf32> -> vector<8x2xf32>
    %c0_15 = arith.constant 0 : index
    %c0_16 = arith.constant 0 : index
    %20 = vector.load %arg7[%c0_15, %c0_16] : memref<1x2xf32, #tpu.memory_space<vmem>>, vector<1x2xf32>
    %21 = vector.broadcast %20 : vector<1x2xf32> to vector<8x2xf32>
    %22 = arith.addf %19, %21 : vector<8x2xf32>
    %c0_17 = arith.constant 0 : index
    %c0_18 = arith.constant 0 : index
    %23 = vector.load %arg8[%c0_17, %c0_18] : memref<8x2xf32, #tpu.memory_space<vmem>>, vector<8x2xf32>
    tpu.vector_store %arg8[%c0_17, %c0_18], %22 {strides = array<i32>} : memref<8x2xf32, #tpu.memory_space<vmem>>, vector<8x2xf32>,
    return
  }
  func.func @transform_0(%arg0: i32) -> (i32, i32) {
    %c0_i32 = arith.constant 0 : i32
    %c0_i32_0 = arith.constant 0 : i32
    return %arg0, %c0_i32 : i32, i32
  }
  func.func @transform_1(%arg0: i32) -> (i32, i32) {
    %c0_i32 = arith.constant 0 : i32
    %c0_i32_0 = arith.constant 0 : i32
    %c0_i32_1 = arith.constant 0 : i32
    return %c0_i32, %c0_i32_0 : i32, i32
  }
  func.func @transform_2(%arg0: i32) -> (i32, i32) {
    %c0_i32 = arith.constant 0 : i32
    %c0_i32_0 = arith.constant 0 : i32
    %c0_i32_1 = arith.constant 0 : i32
    return %c0_i32, %c0_i32_0 : i32, i32
  }
  func.func @transform_3(%arg0: i32) -> (i32, i32) {
    %c0_i32 = arith.constant 0 : i32
    %c0_i32_0 = arith.constant 0 : i32
    %c0_i32_1 = arith.constant 0 : i32
    return %c0_i32, %c0_i32_0 : i32, i32
  }
  func.func @transform_4(%arg0: i32) -> (i32, i32) {
    %c0_i32 = arith.constant 0 : i32
    %c0_i32_0 = arith.constant 0 : i32
    %c0_i32_1 = arith.constant 0 : i32
    return %c0_i32, %c0_i32_0 : i32, i32
  }
  func.func @transform_5(%arg0: i32) -> (i32, i32) {
    %c0_i32 = arith.constant 0 : i32
    %c0_i32_0 = arith.constant 0 : i32
    %c0_i32_1 = arith.constant 0 : i32
    return %c0_i32, %c0_i32_0 : i32, i32
  }
  func.func @transform_6(%arg0: i32) -> (i32, i32) {
    %c0_i32 = arith.constant 0 : i32
    %c0_i32_0 = arith.constant 0 : i32
    %c0_i32_1 = arith.constant 0 : i32
    return %c0_i32, %c0_i32_0 : i32, i32
  }
  func.func @transform_7(%arg0: i32) -> (i32, i32) {
    %c0_i32 = arith.constant 0 : i32
    %c0_i32_0 = arith.constant 0 : i32
    return %arg0, %c0_i32 : i32, i32
  }
}

</mosaic_0001>

<llo_original>
// kernel: mlp_forward.1
$region0: #{mlp_forward.1}
  #allocation0 [shape = 'u32[]', space=smem, size = 0x4, offset = 0x4, fixed_abs, tag = 'smem constant byte address 0x4 - core index']
  #allocation1 [shape = 'u32[144,128]{1,0:T(1,128)}', space=vmem, size = 0x12000, scoped, tag = 'internal scratch']
  %s0 = inlined_call_operand.vmem [shape: f32[16,512], index: 0, kind: input, shape index: {}]
  %s1 = inlined_call_operand.hbm [shape: bf16[512,512], index: 1, kind: input, shape index: {}]
  %s2 = inlined_call_operand.vmem [shape: f32[1,512], index: 2, kind: input, shape index: {}]
  %s3 = inlined_call_operand.hbm [shape: bf16[512,128], index: 3, kind: input, shape index: {}]
  %s4 = inlined_call_operand.vmem [shape: f32[1,128], index: 4, kind: input, shape index: {}]
  %s5 = inlined_call_operand.vmem [shape: bf16[128,2], index: 5, kind: input, shape index: {}]
  %s6 = inlined_call_operand.vmem [shape: f32[1,2], index: 6, kind: input, shape index: {}]
  %s7 = inlined_call_operand.vmem [shape: f32[16,2], index: 7, kind: output, shape index: {}]
  %s8 = sld [smem:[#allocation0]]
  $region69: #{mlp_forward.1} parent=0
    _
  %s10 = ssub.s32 1, %s8
  %s11 = scalar_select 0, %s10, %s8
  $region1: #{mlp_forward.1} parent=0
    #allocation2 [shape = 'u8[524288]{0}', space=vmem, size = 0x80000, scoped, tag = 'input window, operand 1, single buffered']
    #allocation3 [shape = 's32[2]{0}', space=sflag, size = 0x8, scoped, tag = 'scoped memory for mlp_forward.1']
    #allocation4 [shape = 'u8[131072]{0}', space=vmem, size = 0x20000, scoped, tag = 'input window, operand 3, single buffered']
    #allocation5 [shape = 's32[1]{0}', space=sflag, size = 0x4, scoped, tag = 'scoped memory for mlp_forward.1']
    %12 = vsyncpa [#allocation3], 0
    %13 = vsyncpa [#allocation5], 0
    loop: start=0, step=1, limit=4
    $region2: #{mlp_forward.1} parent=1 // loop_pre_header
      _
    $region3: #{mlp_forward.1} parent=1 // loop_header
      %s15 = sphi 0, %s19
      %p16 = scmp.ge.s32.totalorder %s15, 4
      %s25 = sphi 0, %s27
      %s28 = sphi 0, %s25
      %s29 = sphi 0, %s28
      %s45 = sphi 0, %s29
      %s49 = sphi 0, %s49
      %s51 = sphi 0, %s49
      %s52 = sphi 0, %s51
      %s66 = sphi 0, %s52
      %s70 = sphi 0, %s70
      %s72 = sphi 0, %s70
      %s73 = sphi 0, %s72
      %s87 = sphi 0, %s73
      %s91 = sphi 0, %s91
      %s93 = sphi 0, %s91
      %s94 = sphi 0, %s93
      %s108 = sphi 0, %s94
      %s112 = sphi 0, %s112
      %s114 = sphi 0, %s112
      %s115 = sphi 0, %s114
      %s129 = sphi 0, %s115
      %s133 = sphi 0, %s133
      %s135 = sphi 0, %s133
      %s136 = sphi 0, %s135
      %s150 = sphi 0, %s136
      %s154 = sphi 0, %s154
      %s156 = sphi 0, %s154
      %s157 = sphi 0, %s156
      %s171 = sphi 0, %s157
      %s177 = sphi 0, %s179
      %s180 = sphi 0, %s177
      %s181 = sphi 0, %s180
      %s197 = sphi 0, %s181
    $region4: #{mlp_forward.1} parent=1 // loop_header_branch
      %18 = sbr.rel (%p16) target = $region8
    $region5: #{mlp_forward.1} parent=1 // loop_body
      %s20 = ssub.s32 %s15, 1
      %s21 = ssub.s32 %s15, 2
      %s22 = sadd.s32 %s15, 1
      %s23 = ssub.s32 %s15, %s22
      %p24 = scmp.eq.s32.totalorder %s23, 0
      %s26 = sadd.s32 %s25, 1
      %s27 = scalar_select %p24, %s25, %s26
      %p30 = pneg %p24
      %p31 = scmp.eq.s32.totalorder %s15, 1
      %p32 = por %p30, %p31
      %p33 = scmp.ne.s32.totalorder %s25, %s28
      %p34 = scmp.eq.s32.totalorder %s15, 0
      %p35 = por %p33, %p34
      %p36 = scmp.ne.s32.totalorder %s25, %s28
      %p37 = scmp.eq.s32.totalorder %s20, 1
      %p38 = por %p36, %p37
      %p39 = scmp.ne.s32.totalorder %s28, %s29
      %p40 = scmp.eq.s32.totalorder %s20, 0
      %p41 = por %p39, %p40
      %p42 = scmp.ne.s32.totalorder %s28, %s29
      %p43 = scmp.eq.s32.totalorder %s21, 1
      %p44 = por %p42, %p43
      %p46 = scmp.ne.s32.totalorder %s29, %s45
      %p47 = scmp.eq.s32.totalorder %s21, 0
      %p48 = por %p46, %p47
      %s50 = sadd.s32 %s49, 1
      %p53 = scmp.eq.s32.totalorder %s15, 1
      %p54 = scmp.ne.s32.totalorder %s49, %s51
      %p55 = scmp.eq.s32.totalorder %s15, 0
      %p56 = por %p54, %p55
      %p57 = scmp.ne.s32.totalorder %s49, %s51
      %p58 = scmp.eq.s32.totalorder %s20, 1
      %p59 = por %p57, %p58
      %p60 = scmp.ne.s32.totalorder %s51, %s52
      %p61 = scmp.eq.s32.totalorder %s20, 0
      %p62 = por %p60, %p61
      %p63 = scmp.ne.s32.totalorder %s51, %s52
      %p64 = scmp.eq.s32.totalorder %s21, 1
      %p65 = por %p63, %p64
      %p67 = scmp.ne.s32.totalorder %s52, %s66
      %p68 = scmp.eq.s32.totalorder %s21, 0
      %p69 = por %p67, %p68
      %s71 = sadd.s32 %s70, 1
      %p74 = scmp.eq.s32.totalorder %s15, 1
      %p75 = scmp.ne.s32.totalorder %s70, %s72
      %p76 = scmp.eq.s32.totalorder %s15, 0
      %p77 = por %p75, %p76
      %p78 = scmp.ne.s32.totalorder %s70, %s72
      %p79 = scmp.eq.s32.totalorder %s20, 1
      %p80 = por %p78, %p79
      %p81 = scmp.ne.s32.totalorder %s72, %s73
      %p82 = scmp.eq.s32.totalorder %s20, 0
      %p83 = por %p81, %p82
      %p84 = scmp.ne.s32.totalorder %s72, %s73
      %p85 = scmp.eq.s32.totalorder %s21, 1
      %p86 = por %p84, %p85
      %p88 = scmp.ne.s32.totalorder %s73, %s87
      %p89 = scmp.eq.s32.totalorder %s21, 0
      %p90 = por %p88, %p89
      %s92 = sadd.s32 %s91, 1
      %p95 = scmp.eq.s32.totalorder %s15, 1
      %p96 = scmp.ne.s32.totalorder %s91, %s93
      %p97 = scmp.eq.s32.totalorder %s15, 0
      %p98 = por %p96, %p97
      %p99 = scmp.ne.s32.totalorder %s91, %s93
      %p100 = scmp.eq.s32.totalorder %s20, 1
      %p101 = por %p99, %p100
      %p102 = scmp.ne.s32.totalorder %s93, %s94
      %p103 = scmp.eq.s32.totalorder %s20, 0
      %p104 = por %p102, %p103
      %p105 = scmp.ne.s32.totalorder %s93, %s94
      %p106 = scmp.eq.s32.totalorder %s21, 1
      %p107 = por %p105, %p106
      %p109 = scmp.ne.s32.totalorder %s94, %s108
      %p110 = scmp.eq.s32.totalorder %s21, 0
      %p111 = por %p109, %p110
      %s113 = sadd.s32 %s112, 1
      %p116 = scmp.eq.s32.totalorder %s15, 1
      %p117 = scmp.ne.s32.totalorder %s112, %s114
      %p118 = scmp.eq.s32.totalorder %s15, 0
      %p119 = por %p117, %p118
      %p120 = scmp.ne.s32.totalorder %s112, %s114
      %p121 = scmp.eq.s32.totalorder %s20, 1
      %p122 = por %p120, %p121
      %p123 = scmp.ne.s32.totalorder %s114, %s115
      %p124 = scmp.eq.s32.totalorder %s20, 0
      %p125 = por %p123, %p124
      %p126 = scmp.ne.s32.totalorder %s114, %s115
      %p127 = scmp.eq.s32.totalorder %s21, 1
      %p128 = por %p126, %p127
      %p130 = scmp.ne.s32.totalorder %s115, %s129
      %p131 = scmp.eq.s32.totalorder %s21, 0
      %p132 = por %p130, %p131
      %s134 = sadd.s32 %s133, 1
      %p137 = scmp.eq.s32.totalorder %s15, 1
      %p138 = scmp.ne.s32.totalorder %s133, %s135
      %p139 = scmp.eq.s32.totalorder %s15, 0
      %p140 = por %p138, %p139
      %p141 = scmp.ne.s32.totalorder %s133, %s135
      %p142 = scmp.eq.s32.totalorder %s20, 1
      %p143 = por %p141, %p142
      %p144 = scmp.ne.s32.totalorder %s135, %s136
      %p145 = scmp.eq.s32.totalorder %s20, 0
      %p146 = por %p144, %p145
      %p147 = scmp.ne.s32.totalorder %s135, %s136
      %p148 = scmp.eq.s32.totalorder %s21, 1
      %p149 = por %p147, %p148
      %p151 = scmp.ne.s32.totalorder %s136, %s150
      %p152 = scmp.eq.s32.totalorder %s21, 0
      %p153 = por %p151, %p152
      %s155 = sadd.s32 %s154, 1
      %p158 = scmp.eq.s32.totalorder %s15, 1
      %p159 = scmp.ne.s32.totalorder %s154, %s156
      %p160 = scmp.eq.s32.totalorder %s15, 0
      %p161 = por %p159, %p160
      %p162 = scmp.ne.s32.totalorder %s154, %s156
      %p163 = scmp.eq.s32.totalorder %s20, 1
      %p164 = por %p162, %p163
      %p165 = scmp.ne.s32.totalorder %s156, %s157
      %p166 = scmp.eq.s32.totalorder %s20, 0
      %p167 = por %p165, %p166
      %p168 = scmp.ne.s32.totalorder %s156, %s157
      %p169 = scmp.eq.s32.totalorder %s21, 1
      %p170 = por %p168, %p169
      %p172 = scmp.ne.s32.totalorder %s157, %s171
      %p173 = scmp.eq.s32.totalorder %s21, 0
      %p174 = por %p172, %p173
      %s175 = ssub.s32 %s15, %s22
      %p176 = scmp.eq.s32.totalorder %s175, 0
      %s178 = sadd.s32 %s177, 1
      %s179 = scalar_select %p176, %s177, %s178
      %p182 = pneg %p176
      %p183 = scmp.eq.s32.totalorder %s15, 1
      %p184 = por %p182, %p183
      %p185 = scmp.ne.s32.totalorder %s177, %s180
      %p186 = scmp.eq.s32.totalorder %s15, 0
      %p187 = por %p185, %p186
      %p188 = scmp.ne.s32.totalorder %s177, %s180
      %p189 = scmp.eq.s32.totalorder %s20, 1
      %p190 = por %p188, %p189
      %p191 = scmp.ne.s32.totalorder %s180, %s181
      %p192 = scmp.eq.s32.totalorder %s20, 0
      %p193 = por %p191, %p192
      %p194 = scmp.ne.s32.totalorder %s180, %s181
      %p195 = scmp.eq.s32.totalorder %s21, 1
      %p196 = por %p194, %p195
      %p198 = scmp.ne.s32.totalorder %s181, %s197
      %p199 = scmp.eq.s32.totalorder %s21, 0
      %p200 = por %p198, %p199
      %p201 = scmp.le.s32.totalorder 1, %s15
      %p202 = scmp.lt.s32.totalorder %s15, 3
      %p203 = pnand %p201, %p202
      %p204 = pneg %p203
      // Predicated region
      $region9: #{mlp_forward.1} parent=5 // pred_check
        _
      $region10: #{mlp_forward.1} parent=5 // pred_check_branch
        %206 = sbr.rel (%p203) target = $region12
      $region11: #{mlp_forward.1} parent=5 // pred_region
        %s207 = ssub.s32 %s15, 1
        // Predicated region
        $region13: #{mlp_forward.1} parent=11 // pred_check
          %p208 = pneg %p62
        $region14: #{mlp_forward.1} parent=11 // pred_check_branch
          %210 = sbr.rel (%p208) target = $region16
        $region15: #{mlp_forward.1} parent=11 // pred_region
          %s212 = ssub.s32 16384, 16384
          %213 = vsyncadd [#allocation3], %s212
          %s214 = sshll.u32 [#allocation2], 4
          %s215 = int_to_ptr.vmem [resolvable:$true] %s214
          %220 = dma.hbm_to_vmem [thread:$0]  %s1, 16384, %s215, [#allocation3], 256, 256, 16
        $region16: #{mlp_forward.1} parent=11 // pred_fallthru
          _
        // Predicated region
        $region17: #{mlp_forward.1} parent=11 // pred_check
          %p221 = pneg %p83
        $region18: #{mlp_forward.1} parent=11 // pred_check_branch
          %223 = sbr.rel (%p221) target = $region20
        $region19: #{mlp_forward.1} parent=11 // pred_region
          _
        $region20: #{mlp_forward.1} parent=11 // pred_fallthru
          _
        // Predicated region
        $region21: #{mlp_forward.1} parent=11 // pred_check
          %p224 = pneg %p104
        $region22: #{mlp_forward.1} parent=11 // pred_check_branch
          %226 = sbr.rel (%p224) target = $region24
        $region23: #{mlp_forward.1} parent=11 // pred_region
          %s228 = ssub.s32 4096, 4096
          %229 = vsyncadd [#allocation5], %s228
          %s230 = sshll.u32 [#allocation4], 4
          %s231 = int_to_ptr.vmem [resolvable:$true] %s230
          %236 = dma.hbm_to_vmem [thread:$0]  %s3, 4096, %s231, [#allocation5], 64, 64, 4
        $region24: #{mlp_forward.1} parent=11 // pred_fallthru
          _
        // Predicated region
        $region25: #{mlp_forward.1} parent=11 // pred_check
          %p237 = pneg %p125
        $region26: #{mlp_forward.1} parent=11 // pred_check_branch
          %239 = sbr.rel (%p237) target = $region28
        $region27: #{mlp_forward.1} parent=11 // pred_region
          _
        $region28: #{mlp_forward.1} parent=11 // pred_fallthru
          _
        // Predicated region
        $region29: #{mlp_forward.1} parent=11 // pred_check
          %p240 = pneg %p146
        $region30: #{mlp_forward.1} parent=11 // pred_check_branch
          %242 = sbr.rel (%p240) target = $region32
        $region31: #{mlp_forward.1} parent=11 // pred_region
          _
        $region32: #{mlp_forward.1} parent=11 // pred_fallthru
          _
        // Predicated region
        $region33: #{mlp_forward.1} parent=11 // pred_check
          %p243 = pneg %p167
        $region34: #{mlp_forward.1} parent=11 // pred_check_branch
          %245 = sbr.rel (%p243) target = $region36
        $region35: #{mlp_forward.1} parent=11 // pred_region
          _
        $region36: #{mlp_forward.1} parent=11 // pred_fallthru
          _
      $region12: #{mlp_forward.1} parent=5 // pred_fallthru
        _
      %p246 = scmp.lt.s32.totalorder %s15, 2
      // Predicated region
      $region37: #{mlp_forward.1} parent=5 // pred_check
        %p247 = pneg %p246
      $region38: #{mlp_forward.1} parent=5 // pred_check_branch
        %249 = sbr.rel (%p247) target = $region40
      $region39: #{mlp_forward.1} parent=5 // pred_region
        // Predicated region
        $region41: #{mlp_forward.1} parent=39 // pred_check
          %p250 = pneg %p35
        $region42: #{mlp_forward.1} parent=39 // pred_check_branch
          %252 = sbr.rel (%p250) target = $region44
        $region43: #{mlp_forward.1} parent=39 // pred_region
          %p253 = scmp.lt.s32.totalorder %s15, 1
          %s254 = scalar_select %p253, %s15, 1
          %s255 = smul.addr %s254, 4
          %s256 = smul.addr %s255, 8
          %s257 = scalar_lea.vmem %s0, %s256
        $region44: #{mlp_forward.1} parent=39 // pred_fallthru
          _
      $region40: #{mlp_forward.1} parent=5 // pred_fallthru
        _
      %p258 = scmp.le.s32.totalorder 1, %s15
      %p259 = scmp.lt.s32.totalorder %s15, 3
      %p260 = pnand %p258, %p259
      %p261 = pneg %p260
      // Predicated region
      $region45: #{mlp_forward.1} parent=5 // pred_check
        _
      $region46: #{mlp_forward.1} parent=5 // pred_check_branch
        %263 = sbr.rel (%p260) target = $region48
      $region47: #{mlp_forward.1} parent=5 // pred_region
        %s264 = ssub.s32 %s15, 1
        // Predicated region
        $region49: #{mlp_forward.1} parent=47 // pred_check
          %p265 = pneg %p62
        $region50: #{mlp_forward.1} parent=47 // pred_check_branch
          %267 = sbr.rel (%p265) target = $region52
        $region51: #{mlp_forward.1} parent=47 // pred_region
          %268 = dma.done [#allocation3], 16384
        $region52: #{mlp_forward.1} parent=47 // pred_fallthru
          _
        // Predicated region
        $region53: #{mlp_forward.1} parent=47 // pred_check
          %p269 = pneg %p104
        $region54: #{mlp_forward.1} parent=47 // pred_check_branch
          %271 = sbr.rel (%p269) target = $region56
        $region55: #{mlp_forward.1} parent=47 // pred_region
          %272 = dma.done [#allocation5], 4096
        $region56: #{mlp_forward.1} parent=47 // pred_fallthru
          _
        %p273 = scmp.lt.s32.totalorder %s20, 1
        %s274 = scalar_select %p273, %s20, 1
        %s275 = smul.addr %s274, 4
        %s276 = smul.addr %s275, 8
        %s277 = scalar_lea.vmem %s0, %s276
        %p278 = pneg %p41
        %p279 = pneg %p38
        %p280 = pneg %p62
        %p281 = pneg %p59
        %p282 = pneg %p83
        %p283 = pneg %p80
        %p284 = pneg %p104
        %p285 = pneg %p101
        %p286 = pneg %p125
        %p287 = pneg %p122
        %p288 = pneg %p146
        %p289 = pneg %p143
        %p290 = pneg %p167
        %p291 = pneg %p164
        %p292 = pneg %p193
        %p293 = pneg %p190
        %p294 = scmp.lt.s32.totalorder %s20, 1
        %s295 = scalar_select %p294, %s20, 1
        %s296 = smul.addr %s295, 8
        %s297 = scalar_lea.vmem %s7, %s296
        %p298 = scmp.lt.s32.totalorder %s20, 1
        %s299 = scalar_select %p298, %s20, 1
        %s300 = smul.addr %s299, 4
        %s301 = smul.addr %s300, 8
        %s302 = scalar_lea.vmem %s0, %s301
        %p303 = scmp.lt.s32.totalorder %s20, 1
        %s304 = scalar_select %p303, %s20, 1
        %s305 = smul.addr %s304, 8
        %s306 = scalar_lea.vmem %s7, %s305
        %v308 = vld [vmem:[%s302] sm:$0xff]
        %v309 = vld [vmem:[%s302 + $0x8] sm:$0xff]
        %v310 = vld [vmem:[%s302 + $0x10] sm:$0xff]
        %v311 = vld [vmem:[%s302 + $0x18] sm:$0xff]
        %v312 = vpack.c.bf16 %v308, %v308
        %v313 = vpack.c.bf16 %v309, %v309
        %v314 = vpack.c.bf16 %v310, %v310
        %v315 = vpack.c.bf16 %v311, %v311
        %v316 = vld [vmem:[#allocation2] sm:$0xff]
        %v317 = vld [vmem:[#allocation2 + $0x8] sm:$0xff]
        %v318 = vld [vmem:[#allocation2 + $0x10] sm:$0xff]
        %v319 = vld [vmem:[#allocation2 + $0x18] sm:$0xff]
        %v320 = vld [vmem:[#allocation2 + $0x20] sm:$0xff]
        %v321 = vld [vmem:[#allocation2 + $0x28] sm:$0xff]
        %v322 = vld [vmem:[#allocation2 + $0x30] sm:$0xff]
        %v323 = vld [vmem:[#allocation2 + $0x38] sm:$0xff]
        %v324 = vld [vmem:[#allocation2 + $0x40] sm:$0xff]
        %v325 = vld [vmem:[#allocation2 + $0x48] sm:$0xff]
        %v326 = vld [vmem:[#allocation2 + $0x50] sm:$0xff]
        %v327 = vld [vmem:[#allocation2 + $0x58] sm:$0xff]
        %v328 = vld [vmem:[#allocation2 + $0x60] sm:$0xff]
        %v329 = vld [vmem:[#allocation2 + $0x68] sm:$0xff]
        %v330 = vld [vmem:[#allocation2 + $0x70] sm:$0xff]
        %v331 = vld [vmem:[#allocation2 + $0x78] sm:$0xff]
        %v332 = vld [vmem:[#allocation2 + $0x80] sm:$0xff]
        %v333 = vld [vmem:[#allocation2 + $0x88] sm:$0xff]
        %v334 = vld [vmem:[#allocation2 + $0x90] sm:$0xff]
        %v335 = vld [vmem:[#allocation2 + $0x98] sm:$0xff]
        %v336 = vld [vmem:[#allocation2 + $0xa0] sm:$0xff]
        %v337 = vld [vmem:[#allocation2 + $0xa8] sm:$0xff]
        %v338 = vld [vmem:[#allocation2 + $0xb0] sm:$0xff]
        %v339 = vld [vmem:[#allocation2 + $0xb8] sm:$0xff]
        %v340 = vld [vmem:[#allocation2 + $0xc0] sm:$0xff]
        %v341 = vld [vmem:[#allocation2 + $0xc8] sm:$0xff]
        %v342 = vld [vmem:[#allocation2 + $0xd0] sm:$0xff]
        %v343 = vld [vmem:[#allocation2 + $0xd8] sm:$0xff]
        %v344 = vld [vmem:[#allocation2 + $0xe0] sm:$0xff]
        %v345 = vld [vmem:[#allocation2 + $0xe8] sm:$0xff]
        %v346 = vld [vmem:[#allocation2 + $0xf0] sm:$0xff]
        %v347 = vld [vmem:[#allocation2 + $0xf8] sm:$0xff]
        %v348 = vld [vmem:[#allocation2 + $0x100] sm:$0xff]
        %v349 = vld [vmem:[#allocation2 + $0x108] sm:$0xff]
        %v350 = vld [vmem:[#allocation2 + $0x110] sm:$0xff]
        %v351 = vld [vmem:[#allocation2 + $0x118] sm:$0xff]
        %v352 = vld [vmem:[#allocation2 + $0x120] sm:$0xff]
        %v353 = vld [vmem:[#allocation2 + $0x128] sm:$0xff]
        %v354 = vld [vmem:[#allocation2 + $0x130] sm:$0xff]
        %v355 = vld [vmem:[#allocation2 + $0x138] sm:$0xff]
        %v356 = vld [vmem:[#allocation2 + $0x140] sm:$0xff]
        %v357 = vld [vmem:[#allocation2 + $0x148] sm:$0xff]
        %v358 = vld [vmem:[#allocation2 + $0x150] sm:$0xff]
        %v359 = vld [vmem:[#allocation2 + $0x158] sm:$0xff]
        %v360 = vld [vmem:[#allocation2 + $0x160] sm:$0xff]
        %v361 = vld [vmem:[#allocation2 + $0x168] sm:$0xff]
        %v362 = vld [vmem:[#allocation2 + $0x170] sm:$0xff]
        %v363 = vld [vmem:[#allocation2 + $0x178] sm:$0xff]
        %v364 = vld [vmem:[#allocation2 + $0x180] sm:$0xff]
        %v365 = vld [vmem:[#allocation2 + $0x188] sm:$0xff]
        %v366 = vld [vmem:[#allocation2 + $0x190] sm:$0xff]
        %v367 = vld [vmem:[#allocation2 + $0x198] sm:$0xff]
        %v368 = vld [vmem:[#allocation2 + $0x1a0] sm:$0xff]
        %v369 = vld [vmem:[#allocation2 + $0x1a8] sm:$0xff]
        %v370 = vld [vmem:[#allocation2 + $0x1b0] sm:$0xff]
        %v371 = vld [vmem:[#allocation2 + $0x1b8] sm:$0xff]
        %v372 = vld [vmem:[#allocation2 + $0x1c0] sm:$0xff]
        %v373 = vld [vmem:[#allocation2 + $0x1c8] sm:$0xff]
        %v374 = vld [vmem:[#allocation2 + $0x1d0] sm:$0xff]
        %v375 = vld [vmem:[#allocation2 + $0x1d8] sm:$0xff]
        %v376 = vld [vmem:[#allocation2 + $0x1e0] sm:$0xff]
        %v377 = vld [vmem:[#allocation2 + $0x1e8] sm:$0xff]
        %v378 = vld [vmem:[#allocation2 + $0x1f0] sm:$0xff]
        %v379 = vld [vmem:[#allocation2 + $0x1f8] sm:$0xff]
        %v380 = vld [vmem:[#allocation2 + $0x200] sm:$0xff]
        %v381 = vld [vmem:[#allocation2 + $0x208] sm:$0xff]
        %v382 = vld [vmem:[#allocation2 + $0x210] sm:$0xff]
        %v383 = vld [vmem:[#allocation2 + $0x218] sm:$0xff]
        %v384 = vld [vmem:[#allocation2 + $0x220] sm:$0xff]
        %v385 = vld [vmem:[#allocation2 + $0x228] sm:$0xff]
        %v386 = vld [vmem:[#allocation2 + $0x230] sm:$0xff]
        %v387 = vld [vmem:[#allocation2 + $0x238] sm:$0xff]
        %v388 = vld [vmem:[#allocation2 + $0x240] sm:$0xff]
        %v389 = vld [vmem:[#allocation2 + $0x248] sm:$0xff]
        %v390 = vld [vmem:[#allocation2 + $0x250] sm:$0xff]
        %v391 = vld [vmem:[#allocation2 + $0x258] sm:$0xff]
        %v392 = vld [vmem:[#allocation2 + $0x260] sm:$0xff]
        %v393 = vld [vmem:[#allocation2 + $0x268] sm:$0xff]
        %v394 = vld [vmem:[#allocation2 + $0x270] sm:$0xff]
        %v395 = vld [vmem:[#allocation2 + $0x278] sm:$0xff]
        %v396 = vld [vmem:[#allocation2 + $0x280] sm:$0xff]
        %v397 = vld [vmem:[#allocation2 + $0x288] sm:$0xff]
        %v398 = vld [vmem:[#allocation2 + $0x290] sm:$0xff]
        %v399 = vld [vmem:[#allocation2 + $0x298] sm:$0xff]
        %v400 = vld [vmem:[#allocation2 + $0x2a0] sm:$0xff]
        %v401 = vld [vmem:[#allocation2 + $0x2a8] sm:$0xff]
        %v402 = vld [vmem:[#allocation2 + $0x2b0] sm:$0xff]
        %v403 = vld [vmem:[#allocation2 + $0x2b8] sm:$0xff]
        %v404 = vld [vmem:[#allocation2 + $0x2c0] sm:$0xff]
        %v405 = vld [vmem:[#allocation2 + $0x2c8] sm:$0xff]
        %v406 = vld [vmem:[#allocation2 + $0x2d0] sm:$0xff]
        %v407 = vld [vmem:[#allocation2 + $0x2d8] sm:$0xff]
        %v408 = vld [vmem:[#allocation2 + $0x2e0] sm:$0xff]
        %v409 = vld [vmem:[#allocation2 + $0x2e8] sm:$0xff]
        %v410 = vld [vmem:[#allocation2 + $0x2f0] sm:$0xff]
        %v411 = vld [vmem:[#allocation2 + $0x2f8] sm:$0xff]
        %v412 = vld [vmem:[#allocation2 + $0x300] sm:$0xff]
        %v413 = vld [vmem:[#allocation2 + $0x308] sm:$0xff]
        %v414 = vld [vmem:[#allocation2 + $0x310] sm:$0xff]
        %v415 = vld [vmem:[#allocation2 + $0x318] sm:$0xff]
        %v416 = vld [vmem:[#allocation2 + $0x320] sm:$0xff]
        %v417 = vld [vmem:[#allocation2 + $0x328] sm:$0xff]
        %v418 = vld [vmem:[#allocation2 + $0x330] sm:$0xff]
        %v419 = vld [vmem:[#allocation2 + $0x338] sm:$0xff]
        %v420 = vld [vmem:[#allocation2 + $0x340] sm:$0xff]
        %v421 = vld [vmem:[#allocation2 + $0x348] sm:$0xff]
        %v422 = vld [vmem:[#allocation2 + $0x350] sm:$0xff]
        %v423 = vld [vmem:[#allocation2 + $0x358] sm:$0xff]
        %v424 = vld [vmem:[#allocation2 + $0x360] sm:$0xff]
        %v425 = vld [vmem:[#allocation2 + $0x368] sm:$0xff]
        %v426 = vld [vmem:[#allocation2 + $0x370] sm:$0xff]
        %v427 = vld [vmem:[#allocation2 + $0x378] sm:$0xff]
        %v428 = vld [vmem:[#allocation2 + $0x380] sm:$0xff]
        %v429 = vld [vmem:[#allocation2 + $0x388] sm:$0xff]
        %v430 = vld [vmem:[#allocation2 + $0x390] sm:$0xff]
        %v431 = vld [vmem:[#allocation2 + $0x398] sm:$0xff]
        %v432 = vld [vmem:[#allocation2 + $0x3a0] sm:$0xff]
        %v433 = vld [vmem:[#allocation2 + $0x3a8] sm:$0xff]
        %v434 = vld [vmem:[#allocation2 + $0x3b0] sm:$0xff]
        %v435 = vld [vmem:[#allocation2 + $0x3b8] sm:$0xff]
        %v436 = vld [vmem:[#allocation2 + $0x3c0] sm:$0xff]
        %v437 = vld [vmem:[#allocation2 + $0x3c8] sm:$0xff]
        %v438 = vld [vmem:[#allocation2 + $0x3d0] sm:$0xff]
        %v439 = vld [vmem:[#allocation2 + $0x3d8] sm:$0xff]
        %v440 = vld [vmem:[#allocation2 + $0x3e0] sm:$0xff]
        %v441 = vld [vmem:[#allocation2 + $0x3e8] sm:$0xff]
        %v442 = vld [vmem:[#allocation2 + $0x3f0] sm:$0xff]
        %v443 = vld [vmem:[#allocation2 + $0x3f8] sm:$0xff]
        %v444 = vld [vmem:[%s2] sm:$0xf]
        %v446 = vlaneseq
        %v447 = vshrl.u32 %v446, 7
        %v448 = vsub.s32 0, %v447
        %v449 = vrot.slane %v444, %v448
        %v450 = vlaneseq
        %v451 = vshrl.u32 %v450, 7
        %v452 = vsub.s32 1, %v451
        %v453 = vrot.slane %v444, %v452
        %v454 = vlaneseq
        %v455 = vshrl.u32 %v454, 7
        %v456 = vsub.s32 2, %v455
        %v457 = vrot.slane %v444, %v456
        %v458 = vlaneseq
        %v459 = vshrl.u32 %v458, 7
        %v460 = vsub.s32 3, %v459
        %v461 = vrot.slane %v444, %v460
        %v594 = vunpack.c.l.b16 %v316
        %v595 = vunpack.c.h.b16 %v316
        %v596 = vunpack.c.l.b16 %v317
        %v597 = vunpack.c.h.b16 %v317
        %v598 = vunpack.c.l.b16 %v318
        %v599 = vunpack.c.h.b16 %v318
        %v600 = vunpack.c.l.b16 %v319
        %v601 = vunpack.c.h.b16 %v319
        %v602 = vunpack.c.l.b16 %v320
        %v603 = vunpack.c.h.b16 %v320
        %v604 = vunpack.c.l.b16 %v321
        %v605 = vunpack.c.h.b16 %v321
        %v606 = vunpack.c.l.b16 %v322
        %v607 = vunpack.c.h.b16 %v322
        %v608 = vunpack.c.l.b16 %v323
        %v609 = vunpack.c.h.b16 %v323
        %v610 = vunpack.c.l.b16 %v324
        %v611 = vunpack.c.h.b16 %v324
        %v612 = vunpack.c.l.b16 %v325
        %v613 = vunpack.c.h.b16 %v325
        %v614 = vunpack.c.l.b16 %v326
        %v615 = vunpack.c.h.b16 %v326
        %v616 = vunpack.c.l.b16 %v327
        %v617 = vunpack.c.h.b16 %v327
        %v618 = vunpack.c.l.b16 %v328
        %v619 = vunpack.c.h.b16 %v328
        %v620 = vunpack.c.l.b16 %v329
        %v621 = vunpack.c.h.b16 %v329
        %v622 = vunpack.c.l.b16 %v330
        %v623 = vunpack.c.h.b16 %v330
        %v624 = vunpack.c.l.b16 %v331
        %v625 = vunpack.c.h.b16 %v331
        %v626 = vunpack.c.l.b16 %v332
        %v627 = vunpack.c.h.b16 %v332
        %v628 = vunpack.c.l.b16 %v333
        %v629 = vunpack.c.h.b16 %v333
        %v630 = vunpack.c.l.b16 %v334
        %v631 = vunpack.c.h.b16 %v334
        %v632 = vunpack.c.l.b16 %v335
        %v633 = vunpack.c.h.b16 %v335
        %v634 = vunpack.c.l.b16 %v336
        %v635 = vunpack.c.h.b16 %v336
        %v636 = vunpack.c.l.b16 %v337
        %v637 = vunpack.c.h.b16 %v337
        %v638 = vunpack.c.l.b16 %v338
        %v639 = vunpack.c.h.b16 %v338
        %v640 = vunpack.c.l.b16 %v339
        %v641 = vunpack.c.h.b16 %v339
        %v642 = vunpack.c.l.b16 %v340
        %v643 = vunpack.c.h.b16 %v340
        %v644 = vunpack.c.l.b16 %v341
        %v645 = vunpack.c.h.b16 %v341
        %v646 = vunpack.c.l.b16 %v342
        %v647 = vunpack.c.h.b16 %v342
        %v648 = vunpack.c.l.b16 %v343
        %v649 = vunpack.c.h.b16 %v343
        %v650 = vunpack.c.l.b16 %v344
        %v651 = vunpack.c.h.b16 %v344
        %v652 = vunpack.c.l.b16 %v345
        %v653 = vunpack.c.h.b16 %v345
        %v654 = vunpack.c.l.b16 %v346
        %v655 = vunpack.c.h.b16 %v346
        %v656 = vunpack.c.l.b16 %v347
        %v657 = vunpack.c.h.b16 %v347
        %v658 = vunpack.c.l.b16 %v348
        %v659 = vunpack.c.h.b16 %v348
        %v660 = vunpack.c.l.b16 %v349
        %v661 = vunpack.c.h.b16 %v349
        %v662 = vunpack.c.l.b16 %v350
        %v663 = vunpack.c.h.b16 %v350
        %v664 = vunpack.c.l.b16 %v351
        %v665 = vunpack.c.h.b16 %v351
        %v666 = vunpack.c.l.b16 %v352
        %v667 = vunpack.c.h.b16 %v352
        %v668 = vunpack.c.l.b16 %v353
        %v669 = vunpack.c.h.b16 %v353
        %v670 = vunpack.c.l.b16 %v354
        %v671 = vunpack.c.h.b16 %v354
        %v672 = vunpack.c.l.b16 %v355
        %v673 = vunpack.c.h.b16 %v355
        %v674 = vunpack.c.l.b16 %v356
        %v675 = vunpack.c.h.b16 %v356
        %v676 = vunpack.c.l.b16 %v357
        %v677 = vunpack.c.h.b16 %v357
        %v678 = vunpack.c.l.b16 %v358
        %v679 = vunpack.c.h.b16 %v358
        %v680 = vunpack.c.l.b16 %v359
        %v681 = vunpack.c.h.b16 %v359
        %v682 = vunpack.c.l.b16 %v360
        %v683 = vunpack.c.h.b16 %v360
        %v684 = vunpack.c.l.b16 %v361
        %v685 = vunpack.c.h.b16 %v361
        %v686 = vunpack.c.l.b16 %v362
        %v687 = vunpack.c.h.b16 %v362
        %v688 = vunpack.c.l.b16 %v363
        %v689 = vunpack.c.h.b16 %v363
        %v690 = vunpack.c.l.b16 %v364
        %v691 = vunpack.c.h.b16 %v364
        %v692 = vunpack.c.l.b16 %v365
        %v693 = vunpack.c.h.b16 %v365
        %v694 = vunpack.c.l.b16 %v366
        %v695 = vunpack.c.h.b16 %v366
        %v696 = vunpack.c.l.b16 %v367
        %v697 = vunpack.c.h.b16 %v367
        %v698 = vunpack.c.l.b16 %v368
        %v699 = vunpack.c.h.b16 %v368
        %v700 = vunpack.c.l.b16 %v369
        %v701 = vunpack.c.h.b16 %v369
        %v702 = vunpack.c.l.b16 %v370
        %v703 = vunpack.c.h.b16 %v370
        %v704 = vunpack.c.l.b16 %v371
        %v705 = vunpack.c.h.b16 %v371
        %v706 = vunpack.c.l.b16 %v372
        %v707 = vunpack.c.h.b16 %v372
        %v708 = vunpack.c.l.b16 %v373
        %v709 = vunpack.c.h.b16 %v373
        %v710 = vunpack.c.l.b16 %v374
        %v711 = vunpack.c.h.b16 %v374
        %v712 = vunpack.c.l.b16 %v375
        %v713 = vunpack.c.h.b16 %v375
        %v714 = vunpack.c.l.b16 %v376
        %v715 = vunpack.c.h.b16 %v376
        %v716 = vunpack.c.l.b16 %v377
        %v717 = vunpack.c.h.b16 %v377
        %v718 = vunpack.c.l.b16 %v378
        %v719 = vunpack.c.h.b16 %v378
        %v720 = vunpack.c.l.b16 %v379
        %v721 = vunpack.c.h.b16 %v379
        %v722 = vunpack.c.l.b16 %v380
        %v723 = vunpack.c.h.b16 %v380
        %v724 = vunpack.c.l.b16 %v381
        %v725 = vunpack.c.h.b16 %v381
        %v726 = vunpack.c.l.b16 %v382
        %v727 = vunpack.c.h.b16 %v382
        %v728 = vunpack.c.l.b16 %v383
        %v729 = vunpack.c.h.b16 %v383
        %v730 = vunpack.c.l.b16 %v384
        %v731 = vunpack.c.h.b16 %v384
        %v732 = vunpack.c.l.b16 %v385
        %v733 = vunpack.c.h.b16 %v385
        %v734 = vunpack.c.l.b16 %v386
        %v735 = vunpack.c.h.b16 %v386
        %v736 = vunpack.c.l.b16 %v387
        %v737 = vunpack.c.h.b16 %v387
        %v738 = vunpack.c.l.b16 %v388
        %v739 = vunpack.c.h.b16 %v388
        %v740 = vunpack.c.l.b16 %v389
        %v741 = vunpack.c.h.b16 %v389
        %v742 = vunpack.c.l.b16 %v390
        %v743 = vunpack.c.h.b16 %v390
        %v744 = vunpack.c.l.b16 %v391
        %v745 = vunpack.c.h.b16 %v391
        %v746 = vunpack.c.l.b16 %v392
        %v747 = vunpack.c.h.b16 %v392
        %v748 = vunpack.c.l.b16 %v393
        %v749 = vunpack.c.h.b16 %v393
        %v750 = vunpack.c.l.b16 %v394
        %v751 = vunpack.c.h.b16 %v394
        %v752 = vunpack.c.l.b16 %v395
        %v753 = vunpack.c.h.b16 %v395
        %v754 = vunpack.c.l.b16 %v396
        %v755 = vunpack.c.h.b16 %v396
        %v756 = vunpack.c.l.b16 %v397
        %v757 = vunpack.c.h.b16 %v397
        %v758 = vunpack.c.l.b16 %v398
        %v759 = vunpack.c.h.b16 %v398
        %v760 = vunpack.c.l.b16 %v399
        %v761 = vunpack.c.h.b16 %v399
        %v762 = vunpack.c.l.b16 %v400
        %v763 = vunpack.c.h.b16 %v400
        %v764 = vunpack.c.l.b16 %v401
        %v765 = vunpack.c.h.b16 %v401
        %v766 = vunpack.c.l.b16 %v402
        %v767 = vunpack.c.h.b16 %v402
        %v768 = vunpack.c.l.b16 %v403
        %v769 = vunpack.c.h.b16 %v403
        %v770 = vunpack.c.l.b16 %v404
        %v771 = vunpack.c.h.b16 %v404
        %v772 = vunpack.c.l.b16 %v405
        %v773 = vunpack.c.h.b16 %v405
        %v774 = vunpack.c.l.b16 %v406
        %v775 = vunpack.c.h.b16 %v406
        %v776 = vunpack.c.l.b16 %v407
        %v777 = vunpack.c.h.b16 %v407
        %v778 = vunpack.c.l.b16 %v408
        %v779 = vunpack.c.h.b16 %v408
        %v780 = vunpack.c.l.b16 %v409
        %v781 = vunpack.c.h.b16 %v409
        %v782 = vunpack.c.l.b16 %v410
        %v783 = vunpack.c.h.b16 %v410
        %v784 = vunpack.c.l.b16 %v411
        %v785 = vunpack.c.h.b16 %v411
        %v786 = vunpack.c.l.b16 %v412
        %v787 = vunpack.c.h.b16 %v412
        %v788 = vunpack.c.l.b16 %v413
        %v789 = vunpack.c.h.b16 %v413
        %v790 = vunpack.c.l.b16 %v414
        %v791 = vunpack.c.h.b16 %v414
        %v792 = vunpack.c.l.b16 %v415
        %v793 = vunpack.c.h.b16 %v415
        %v794 = vunpack.c.l.b16 %v416
        %v795 = vunpack.c.h.b16 %v416
        %v796 = vunpack.c.l.b16 %v417
        %v797 = vunpack.c.h.b16 %v417
        %v798 = vunpack.c.l.b16 %v418
        %v799 = vunpack.c.h.b16 %v418
        %v800 = vunpack.c.l.b16 %v419
        %v801 = vunpack.c.h.b16 %v419
        %v802 = vunpack.c.l.b16 %v420
        %v803 = vunpack.c.h.b16 %v420
        %v804 = vunpack.c.l.b16 %v421
        %v805 = vunpack.c.h.b16 %v421
        %v806 = vunpack.c.l.b16 %v422
        %v807 = vunpack.c.h.b16 %v422
        %v808 = vunpack.c.l.b16 %v423
        %v809 = vunpack.c.h.b16 %v423
        %v810 = vunpack.c.l.b16 %v424
        %v811 = vunpack.c.h.b16 %v424
        %v812 = vunpack.c.l.b16 %v425
        %v813 = vunpack.c.h.b16 %v425
        %v814 = vunpack.c.l.b16 %v426
        %v815 = vunpack.c.h.b16 %v426
        %v816 = vunpack.c.l.b16 %v427
        %v817 = vunpack.c.h.b16 %v427
        %v818 = vunpack.c.l.b16 %v428
        %v819 = vunpack.c.h.b16 %v428
        %v820 = vunpack.c.l.b16 %v429
        %v821 = vunpack.c.h.b16 %v429
        %v822 = vunpack.c.l.b16 %v430
        %v823 = vunpack.c.h.b16 %v430
        %v824 = vunpack.c.l.b16 %v431
        %v825 = vunpack.c.h.b16 %v431
        %v826 = vunpack.c.l.b16 %v432
        %v827 = vunpack.c.h.b16 %v432
        %v828 = vunpack.c.l.b16 %v433
        %v829 = vunpack.c.h.b16 %v433
        %v830 = vunpack.c.l.b16 %v434
        %v831 = vunpack.c.h.b16 %v434
        %v832 = vunpack.c.l.b16 %v435
        %v833 = vunpack.c.h.b16 %v435
        %v834 = vunpack.c.l.b16 %v436
        %v835 = vunpack.c.h.b16 %v436
        %v836 = vunpack.c.l.b16 %v437
        %v837 = vunpack.c.h.b16 %v437
        %v838 = vunpack.c.l.b16 %v438
        %v839 = vunpack.c.h.b16 %v438
        %v840 = vunpack.c.l.b16 %v439
        %v841 = vunpack.c.h.b16 %v439
        %v842 = vunpack.c.l.b16 %v440
        %v843 = vunpack.c.h.b16 %v440
        %v844 = vunpack.c.l.b16 %v441
        %v845 = vunpack.c.h.b16 %v441
        %v846 = vunpack.c.l.b16 %v442
        %v847 = vunpack.c.h.b16 %v442
        %v848 = vunpack.c.l.b16 %v443
        %v849 = vunpack.c.h.b16 %v443
        %v850 = vpack.c.b16 %v598, %v594
        %v851 = vpack.c.b16 %v599, %v595
        %v852 = vpack.c.b16 %v600, %v596
        %v853 = vpack.c.b16 %v601, %v597
        %v854 = vpack.c.b16 %v606, %v602
        %v855 = vpack.c.b16 %v607, %v603
        %v856 = vpack.c.b16 %v608, %v604
        %v857 = vpack.c.b16 %v609, %v605
        %v858 = vpack.c.b16 %v614, %v610
        %v859 = vpack.c.b16 %v615, %v611
        %v860 = vpack.c.b16 %v616, %v612
        %v861 = vpack.c.b16 %v617, %v613
        %v862 = vpack.c.b16 %v622, %v618
        %v863 = vpack.c.b16 %v623, %v619
        %v864 = vpack.c.b16 %v624, %v620
        %v865 = vpack.c.b16 %v625, %v621
        %v866 = vpack.c.b16 %v630, %v626
        %v867 = vpack.c.b16 %v631, %v627
        %v868 = vpack.c.b16 %v632, %v628
        %v869 = vpack.c.b16 %v633, %v629
        %v870 = vpack.c.b16 %v638, %v634
        %v871 = vpack.c.b16 %v639, %v635
        %v872 = vpack.c.b16 %v640, %v636
        %v873 = vpack.c.b16 %v641, %v637
        %v874 = vpack.c.b16 %v646, %v642
        %v875 = vpack.c.b16 %v647, %v643
        %v876 = vpack.c.b16 %v648, %v644
        %v877 = vpack.c.b16 %v649, %v645
        %v878 = vpack.c.b16 %v654, %v650
        %v879 = vpack.c.b16 %v655, %v651
        %v880 = vpack.c.b16 %v656, %v652
        %v881 = vpack.c.b16 %v657, %v653
        %v882 = vpack.c.b16 %v662, %v658
        %v883 = vpack.c.b16 %v663, %v659
        %v884 = vpack.c.b16 %v664, %v660
        %v885 = vpack.c.b16 %v665, %v661
        %v886 = vpack.c.b16 %v670, %v666
        %v887 = vpack.c.b16 %v671, %v667
        %v888 = vpack.c.b16 %v672, %v668
        %v889 = vpack.c.b16 %v673, %v669
        %v890 = vpack.c.b16 %v678, %v674
        %v891 = vpack.c.b16 %v679, %v675
        %v892 = vpack.c.b16 %v680, %v676
        %v893 = vpack.c.b16 %v681, %v677
        %v894 = vpack.c.b16 %v686, %v682
        %v895 = vpack.c.b16 %v687, %v683
        %v896 = vpack.c.b16 %v688, %v684
        %v897 = vpack.c.b16 %v689, %v685
        %v898 = vpack.c.b16 %v694, %v690
        %v899 = vpack.c.b16 %v695, %v691
        %v900 = vpack.c.b16 %v696, %v692
        %v901 = vpack.c.b16 %v697, %v693
        %v902 = vpack.c.b16 %v702, %v698
        %v903 = vpack.c.b16 %v703, %v699
        %v904 = vpack.c.b16 %v704, %v700
        %v905 = vpack.c.b16 %v705, %v701
        %v906 = vpack.c.b16 %v710, %v706
        %v907 = vpack.c.b16 %v711, %v707
        %v908 = vpack.c.b16 %v712, %v708
        %v909 = vpack.c.b16 %v713, %v709
        %v910 = vpack.c.b16 %v718, %v714
        %v911 = vpack.c.b16 %v719, %v715
        %v912 = vpack.c.b16 %v720, %v716
        %v913 = vpack.c.b16 %v721, %v717
        %v914 = vpack.c.b16 %v726, %v722
        %v915 = vpack.c.b16 %v727, %v723
        %v916 = vpack.c.b16 %v728, %v724
        %v917 = vpack.c.b16 %v729, %v725
        %v918 = vpack.c.b16 %v734, %v730
        %v919 = vpack.c.b16 %v735, %v731
        %v920 = vpack.c.b16 %v736, %v732
        %v921 = vpack.c.b16 %v737, %v733
        %v922 = vpack.c.b16 %v742, %v738
        %v923 = vpack.c.b16 %v743, %v739
        %v924 = vpack.c.b16 %v744, %v740
        %v925 = vpack.c.b16 %v745, %v741
        %v926 = vpack.c.b16 %v750, %v746
        %v927 = vpack.c.b16 %v751, %v747
        %v928 = vpack.c.b16 %v752, %v748
        %v929 = vpack.c.b16 %v753, %v749
        %v930 = vpack.c.b16 %v758, %v754
        %v931 = vpack.c.b16 %v759, %v755
        %v932 = vpack.c.b16 %v760, %v756
        %v933 = vpack.c.b16 %v761, %v757
        %v934 = vpack.c.b16 %v766, %v762
        %v935 = vpack.c.b16 %v767, %v763
        %v936 = vpack.c.b16 %v768, %v764
        %v937 = vpack.c.b16 %v769, %v765
        %v938 = vpack.c.b16 %v774, %v770
        %v939 = vpack.c.b16 %v775, %v771
        %v940 = vpack.c.b16 %v776, %v772
        %v941 = vpack.c.b16 %v777, %v773
        %v942 = vpack.c.b16 %v782, %v778
        %v943 = vpack.c.b16 %v783, %v779
        %v944 = vpack.c.b16 %v784, %v780
        %v945 = vpack.c.b16 %v785, %v781
        %v946 = vpack.c.b16 %v790, %v786
        %v947 = vpack.c.b16 %v791, %v787
        %v948 = vpack.c.b16 %v792, %v788
        %v949 = vpack.c.b16 %v793, %v789
        %v950 = vpack.c.b16 %v798, %v794
        %v951 = vpack.c.b16 %v799, %v795
        %v952 = vpack.c.b16 %v800, %v796
        %v953 = vpack.c.b16 %v801, %v797
        %v954 = vpack.c.b16 %v806, %v802
        %v955 = vpack.c.b16 %v807, %v803
        %v956 = vpack.c.b16 %v808, %v804
        %v957 = vpack.c.b16 %v809, %v805
        %v958 = vpack.c.b16 %v814, %v810
        %v959 = vpack.c.b16 %v815, %v811
        %v960 = vpack.c.b16 %v816, %v812
        %v961 = vpack.c.b16 %v817, %v813
        %v962 = vpack.c.b16 %v822, %v818
        %v963 = vpack.c.b16 %v823, %v819
        %v964 = vpack.c.b16 %v824, %v820
        %v965 = vpack.c.b16 %v825, %v821
        %v966 = vpack.c.b16 %v830, %v826
        %v967 = vpack.c.b16 %v831, %v827
        %v968 = vpack.c.b16 %v832, %v828
        %v969 = vpack.c.b16 %v833, %v829
        %v970 = vpack.c.b16 %v838, %v834
        %v971 = vpack.c.b16 %v839, %v835
        %v972 = vpack.c.b16 %v840, %v836
        %v973 = vpack.c.b16 %v841, %v837
        %v974 = vpack.c.b16 %v846, %v842
        %v975 = vpack.c.b16 %v847, %v843
        %v976 = vpack.c.b16 %v848, %v844
        %v977 = vpack.c.b16 %v849, %v845
        %1106 = vmatprep.subr.bf16.mxu0 %v879
        %1107 = vmatpush1.bf16.msra.mxu0 %v878
        %1108 = vmatprep.subr.bf16.mxu0 %v875
        %1109 = vmatpush1.bf16.msra.mxu0 %v874
        %1110 = vmatprep.subr.bf16.mxu0 %v871
        %1111 = vmatpush1.bf16.msra.mxu0 %v870
        %1112 = vmatprep.subr.bf16.mxu0 %v867
        %1113 = vmatpush1.bf16.msra.mxu0 %v866
        %1114 = vmatprep.subr.bf16.mxu0 %v863
        %1115 = vmatpush1.bf16.msra.mxu0 %v862
        %1116 = vmatprep.subr.bf16.mxu0 %v859
        %1117 = vmatpush1.bf16.msra.mxu0 %v858
        %1118 = vmatprep.subr.bf16.mxu0 %v855
        %1119 = vmatpush1.bf16.msra.mxu0 %v854
        %1120 = vmatprep.subr.bf16.mxu0 %v851
        %1121 = vmatpush1.bf16.msra.mxu0 %v850
        %1122 = vmatprep.subr.bf16.mxu0 %v911
        %1123 = vmatpush2.bf16.msra.mxu0 %v910
        %1124 = vmatprep.subr.bf16.mxu0 %v907
        %1125 = vmatpush2.bf16.msra.mxu0 %v906
        %1126 = vmatprep.subr.bf16.mxu0 %v903
        %1127 = vmatpush2.bf16.msra.mxu0 %v902
        %1128 = vmatprep.subr.bf16.mxu0 %v899
        %1129 = vmatpush2.bf16.msra.mxu0 %v898
        %1130 = vmatprep.subr.bf16.mxu0 %v895
        %1131 = vmatpush2.bf16.msra.mxu0 %v894
        %1132 = vmatprep.subr.bf16.mxu0 %v891
        %1133 = vmatpush2.bf16.msra.mxu0 %v890
        %1134 = vmatprep.subr.bf16.mxu0 %v887
        %1135 = vmatpush2.bf16.msra.mxu0 %v886
        %1136 = vmatprep.subr.bf16.mxu0 %v883
        %1137 = vmatpush2.bf16.msra.mxu0 %v882
        %1138 = vmatprep.mubr.bf16.mxu0 %v313
        %1139 = vmatmul.mubr.bf16.gmra.mxu0 %v312
        %v1140 = vpop.f32.mrf.mxu0
        %v1141 = vadd.f32 %v449, %v1140
        %v1142 = vpop.f32.mrf.mxu0
        %v1143 = vadd.f32 %v453, %v1142
        %v1144 = vpop.f32.mrf.mxu0
        %v1145 = vpop.f32.mrf.mxu0
        %1146 = vdwg.mxu0
        %1147 = vmatprep.subr.bf16.mxu0 %v943
        %1148 = vmatpush1.bf16.msra.mxu0 %v942
        %1149 = vmatprep.subr.bf16.mxu0 %v939
        %1150 = vmatpush1.bf16.msra.mxu0 %v938
        %1151 = vmatprep.subr.bf16.mxu0 %v935
        %1152 = vmatpush1.bf16.msra.mxu0 %v934
        %1153 = vmatprep.subr.bf16.mxu0 %v931
        %1154 = vmatpush1.bf16.msra.mxu0 %v930
        %1155 = vmatprep.subr.bf16.mxu0 %v927
        %1156 = vmatpush1.bf16.msra.mxu0 %v926
        %1157 = vmatprep.subr.bf16.mxu0 %v923
        %1158 = vmatpush1.bf16.msra.mxu0 %v922
        %1159 = vmatprep.subr.bf16.mxu0 %v919
        %1160 = vmatpush1.bf16.msra.mxu0 %v918
        %1161 = vmatprep.subr.bf16.mxu0 %v915
        %1162 = vmatpush1.bf16.msra.mxu0 %v914
        %1163 = vmatprep.subr.bf16.mxu0 %v975
        %1164 = vmatpush2.bf16.msra.mxu0 %v974
        %1165 = vmatprep.subr.bf16.mxu0 %v971
        %1166 = vmatpush2.bf16.msra.mxu0 %v970
        %1167 = vmatprep.subr.bf16.mxu0 %v967
        %1168 = vmatpush2.bf16.msra.mxu0 %v966
        %1169 = vmatprep.subr.bf16.mxu0 %v963
        %1170 = vmatpush2.bf16.msra.mxu0 %v962
        %1171 = vmatprep.subr.bf16.mxu0 %v959
        %1172 = vmatpush2.bf16.msra.mxu0 %v958
        %1173 = vmatprep.subr.bf16.mxu0 %v955
        %1174 = vmatpush2.bf16.msra.mxu0 %v954
        %1175 = vmatprep.subr.bf16.mxu0 %v951
        %1176 = vmatpush2.bf16.msra.mxu0 %v950
        %1177 = vmatprep.subr.bf16.mxu0 %v947
        %1178 = vmatpush2.bf16.msra.mxu0 %v946
        %1179 = vmatprep.mubr.bf16.mxu0 %v315
        %1180 = vmatmul.mubr.bf16.gmra.mxu0 %v314
        %v1181 = vpop.f32.mrf.mxu0
        %v1182 = vadd.f32 %v1141, %v1181
        %v1183 = vpop.f32.mrf.mxu0
        %v1184 = vadd.f32 %v1143, %v1183
        %v1185 = vpop.f32.mrf.mxu0
        %v1186 = vpop.f32.mrf.mxu0
        %1187 = vdwg.mxu0
        %1188 = vmatprep.subr.bf16.mxu0 %v881
        %1189 = vmatpush1.bf16.msra.mxu0 %v880
        %1190 = vmatprep.subr.bf16.mxu0 %v877
        %1191 = vmatpush1.bf16.msra.mxu0 %v876
        %1192 = vmatprep.subr.bf16.mxu0 %v873
        %1193 = vmatpush1.bf16.msra.mxu0 %v872
        %1194 = vmatprep.subr.bf16.mxu0 %v869
        %1195 = vmatpush1.bf16.msra.mxu0 %v868
        %1196 = vmatprep.subr.bf16.mxu0 %v865
        %1197 = vmatpush1.bf16.msra.mxu0 %v864
        %1198 = vmatprep.subr.bf16.mxu0 %v861
        %1199 = vmatpush1.bf16.msra.mxu0 %v860
        %1200 = vmatprep.subr.bf16.mxu0 %v857
        %1201 = vmatpush1.bf16.msra.mxu0 %v856
        %1202 = vmatprep.subr.bf16.mxu0 %v853
        %1203 = vmatpush1.bf16.msra.mxu0 %v852
        %1204 = vmatprep.subr.bf16.mxu0 %v913
        %1205 = vmatpush2.bf16.msra.mxu0 %v912
        %1206 = vmatprep.subr.bf16.mxu0 %v909
        %1207 = vmatpush2.bf16.msra.mxu0 %v908
        %1208 = vmatprep.subr.bf16.mxu0 %v905
        %1209 = vmatpush2.bf16.msra.mxu0 %v904
        %1210 = vmatprep.subr.bf16.mxu0 %v901
        %1211 = vmatpush2.bf16.msra.mxu0 %v900
        %1212 = vmatprep.subr.bf16.mxu0 %v897
        %1213 = vmatpush2.bf16.msra.mxu0 %v896
        %1214 = vmatprep.subr.bf16.mxu0 %v893
        %1215 = vmatpush2.bf16.msra.mxu0 %v892
        %1216 = vmatprep.subr.bf16.mxu0 %v889
        %1217 = vmatpush2.bf16.msra.mxu0 %v888
        %1218 = vmatprep.subr.bf16.mxu0 %v885
        %1219 = vmatpush2.bf16.msra.mxu0 %v884
        %1220 = vmatprep.mubr.bf16.mxu0 %v313
        %1221 = vmatmul.mubr.bf16.gmra.mxu0 %v312
        %v1222 = vpop.f32.mrf.mxu0
        %v1223 = vadd.f32 %v457, %v1222
        %v1224 = vpop.f32.mrf.mxu0
        %v1225 = vadd.f32 %v461, %v1224
        %v1226 = vpop.f32.mrf.mxu0
        %v1227 = vpop.f32.mrf.mxu0
        %1228 = vdwg.mxu0
        %1229 = vmatprep.subr.bf16.mxu0 %v945
        %1230 = vmatpush1.bf16.msra.mxu0 %v944
        %1231 = vmatprep.subr.bf16.mxu0 %v941
        %1232 = vmatpush1.bf16.msra.mxu0 %v940
        %1233 = vmatprep.subr.bf16.mxu0 %v937
        %1234 = vmatpush1.bf16.msra.mxu0 %v936
        %1235 = vmatprep.subr.bf16.mxu0 %v933
        %1236 = vmatpush1.bf16.msra.mxu0 %v932
        %1237 = vmatprep.subr.bf16.mxu0 %v929
        %1238 = vmatpush1.bf16.msra.mxu0 %v928
        %1239 = vmatprep.subr.bf16.mxu0 %v925
        %1240 = vmatpush1.bf16.msra.mxu0 %v924
        %1241 = vmatprep.subr.bf16.mxu0 %v921
        %1242 = vmatpush1.bf16.msra.mxu0 %v920
        %1243 = vmatprep.subr.bf16.mxu0 %v917
        %1244 = vmatpush1.bf16.msra.mxu0 %v916
        %1245 = vmatprep.subr.bf16.mxu0 %v977
        %1246 = vmatpush2.bf16.msra.mxu0 %v976
        %1247 = vmatprep.subr.bf16.mxu0 %v973
        %1248 = vmatpush2.bf16.msra.mxu0 %v972
        %1249 = vmatprep.subr.bf16.mxu0 %v969
        %1250 = vmatpush2.bf16.msra.mxu0 %v968
        %1251 = vmatprep.subr.bf16.mxu0 %v965
        %1252 = vmatpush2.bf16.msra.mxu0 %v964
        %1253 = vmatprep.subr.bf16.mxu0 %v961
        %1254 = vmatpush2.bf16.msra.mxu0 %v960
        %1255 = vmatprep.subr.bf16.mxu0 %v957
        %1256 = vmatpush2.bf16.msra.mxu0 %v956
        %1257 = vmatprep.subr.bf16.mxu0 %v953
        %1258 = vmatpush2.bf16.msra.mxu0 %v952
        %1259 = vmatprep.subr.bf16.mxu0 %v949
        %1260 = vmatpush2.bf16.msra.mxu0 %v948
        %1261 = vmatprep.mubr.bf16.mxu0 %v315
        %1262 = vmatmul.mubr.bf16.gmra.mxu0 %v314
        %v1263 = vpop.f32.mrf.mxu0
        %v1264 = vadd.f32 %v1223, %v1263
        %v1265 = vpop.f32.mrf.mxu0
        %v1266 = vadd.f32 %v1225, %v1265
        %v1267 = vpop.f32.mrf.mxu0
        %v1268 = vpop.f32.mrf.mxu0
        %1269 = vdwg.mxu0
        %v1270 = vmax.f32 %v1182, 0.0
        %v1271 = vmax.f32 %v1184, 0.0
        %v1272 = vmax.f32 %v1264, 0.0
        %v1273 = vmax.f32 %v1266, 0.0
        %v1274 = vpack.c.bf16 %v1270, %v1270
        %v1275 = vpack.c.bf16 %v1271, %v1271
        %v1276 = vpack.c.bf16 %v1272, %v1272
        %v1277 = vpack.c.bf16 %v1273, %v1273
        %v1278 = vld [vmem:[#allocation4] sm:$0xf]
        %v1279 = vld [vmem:[#allocation4 + $0x4] sm:$0xf]
        %v1280 = vld [vmem:[#allocation4 + $0x8] sm:$0xf]
        %v1281 = vld [vmem:[#allocation4 + $0xc] sm:$0xf]
        %v1282 = vld [vmem:[#allocation4 + $0x10] sm:$0xf]
        %v1283 = vld [vmem:[#allocation4 + $0x14] sm:$0xf]
        %v1284 = vld [vmem:[#allocation4 + $0x18] sm:$0xf]
        %v1285 = vld [vmem:[#allocation4 + $0x1c] sm:$0xf]
        %v1286 = vld [vmem:[#allocation4 + $0x20] sm:$0xf]
        %v1287 = vld [vmem:[#allocation4 + $0x24] sm:$0xf]
        %v1288 = vld [vmem:[#allocation4 + $0x28] sm:$0xf]
        %v1289 = vld [vmem:[#allocation4 + $0x2c] sm:$0xf]
        %v1290 = vld [vmem:[#allocation4 + $0x30] sm:$0xf]
        %v1291 = vld [vmem:[#allocation4 + $0x34] sm:$0xf]
        %v1292 = vld [vmem:[#allocation4 + $0x38] sm:$0xf]
        %v1293 = vld [vmem:[#allocation4 + $0x3c] sm:$0xf]
        %v1294 = vld [vmem:[#allocation4 + $0x40] sm:$0xf]
        %v1295 = vld [vmem:[#allocation4 + $0x44] sm:$0xf]
        %v1296 = vld [vmem:[#allocation4 + $0x48] sm:$0xf]
        %v1297 = vld [vmem:[#allocation4 + $0x4c] sm:$0xf]
        %v1298 = vld [vmem:[#allocation4 + $0x50] sm:$0xf]
        %v1299 = vld [vmem:[#allocation4 + $0x54] sm:$0xf]
        %v1300 = vld [vmem:[#allocation4 + $0x58] sm:$0xf]
        %v1301 = vld [vmem:[#allocation4 + $0x5c] sm:$0xf]
        %v1302 = vld [vmem:[#allocation4 + $0x60] sm:$0xf]
        %v1303 = vld [vmem:[#allocation4 + $0x64] sm:$0xf]
        %v1304 = vld [vmem:[#allocation4 + $0x68] sm:$0xf]
        %v1305 = vld [vmem:[#allocation4 + $0x6c] sm:$0xf]
        %v1306 = vld [vmem:[#allocation4 + $0x70] sm:$0xf]
        %v1307 = vld [vmem:[#allocation4 + $0x74] sm:$0xf]
        %v1308 = vld [vmem:[#allocation4 + $0x78] sm:$0xf]
        %v1309 = vld [vmem:[#allocation4 + $0x7c] sm:$0xf]
        %v1310 = vld [vmem:[#allocation4 + $0x80] sm:$0xf]
        %v1311 = vld [vmem:[#allocation4 + $0x84] sm:$0xf]
        %v1312 = vld [vmem:[#allocation4 + $0x88] sm:$0xf]
        %v1313 = vld [vmem:[#allocation4 + $0x8c] sm:$0xf]
        %v1314 = vld [vmem:[#allocation4 + $0x90] sm:$0xf]
        %v1315 = vld [vmem:[#allocation4 + $0x94] sm:$0xf]
        %v1316 = vld [vmem:[#allocation4 + $0x98] sm:$0xf]
        %v1317 = vld [vmem:[#allocation4 + $0x9c] sm:$0xf]
        %v1318 = vld [vmem:[#allocation4 + $0xa0] sm:$0xf]
        %v1319 = vld [vmem:[#allocation4 + $0xa4] sm:$0xf]
        %v1320 = vld [vmem:[#allocation4 + $0xa8] sm:$0xf]
        %v1321 = vld [vmem:[#allocation4 + $0xac] sm:$0xf]
        %v1322 = vld [vmem:[#allocation4 + $0xb0] sm:$0xf]
        %v1323 = vld [vmem:[#allocation4 + $0xb4] sm:$0xf]
        %v1324 = vld [vmem:[#allocation4 + $0xb8] sm:$0xf]
        %v1325 = vld [vmem:[#allocation4 + $0xbc] sm:$0xf]
        %v1326 = vld [vmem:[#allocation4 + $0xc0] sm:$0xf]
        %v1327 = vld [vmem:[#allocation4 + $0xc4] sm:$0xf]
        %v1328 = vld [vmem:[#allocation4 + $0xc8] sm:$0xf]
        %v1329 = vld [vmem:[#allocation4 + $0xcc] sm:$0xf]
        %v1330 = vld [vmem:[#allocation4 + $0xd0] sm:$0xf]
        %v1331 = vld [vmem:[#allocation4 + $0xd4] sm:$0xf]
        %v1332 = vld [vmem:[#allocation4 + $0xd8] sm:$0xf]
        %v1333 = vld [vmem:[#allocation4 + $0xdc] sm:$0xf]
        %v1334 = vld [vmem:[#allocation4 + $0xe0] sm:$0xf]
        %v1335 = vld [vmem:[#allocation4 + $0xe4] sm:$0xf]
        %v1336 = vld [vmem:[#allocation4 + $0xe8] sm:$0xf]
        %v1337 = vld [vmem:[#allocation4 + $0xec] sm:$0xf]
        %v1338 = vld [vmem:[#allocation4 + $0xf0] sm:$0xf]
        %v1339 = vld [vmem:[#allocation4 + $0xf4] sm:$0xf]
        %v1340 = vld [vmem:[#allocation4 + $0xf8] sm:$0xf]
        %v1341 = vld [vmem:[#allocation4 + $0xfc] sm:$0xf]
        %v1342 = vld [vmem:[%s4] sm:$0x1]
        %v1344 = vlaneseq
        %v1345 = vshrl.u32 %v1344, 7
        %v1346 = vsub.s32 0, %v1345
        %v1347 = vrot.slane %v1342, %v1346
        %v1413 = vunpack.c.l.b16 %v1278
        %v1414 = vunpack.c.l.b16 %v1279
        %v1415 = vunpack.c.l.b16 %v1280
        %v1416 = vunpack.c.l.b16 %v1281
        %v1417 = vunpack.c.l.b16 %v1282
        %v1418 = vunpack.c.l.b16 %v1283
        %v1419 = vunpack.c.l.b16 %v1284
        %v1420 = vunpack.c.l.b16 %v1285
        %v1421 = vunpack.c.l.b16 %v1286
        %v1422 = vunpack.c.l.b16 %v1287
        %v1423 = vunpack.c.l.b16 %v1288
        %v1424 = vunpack.c.l.b16 %v1289
        %v1425 = vunpack.c.l.b16 %v1290
        %v1426 = vunpack.c.l.b16 %v1291
        %v1427 = vunpack.c.l.b16 %v1292
        %v1428 = vunpack.c.l.b16 %v1293
        %v1429 = vunpack.c.l.b16 %v1294
        %v1430 = vunpack.c.l.b16 %v1295
        %v1431 = vunpack.c.l.b16 %v1296
        %v1432 = vunpack.c.l.b16 %v1297
        %v1433 = vunpack.c.l.b16 %v1298
        %v1434 = vunpack.c.l.b16 %v1299
        %v1435 = vunpack.c.l.b16 %v1300
        %v1436 = vunpack.c.l.b16 %v1301
        %v1437 = vunpack.c.l.b16 %v1302
        %v1438 = vunpack.c.l.b16 %v1303
        %v1439 = vunpack.c.l.b16 %v1304
        %v1440 = vunpack.c.l.b16 %v1305
        %v1441 = vunpack.c.l.b16 %v1306
        %v1442 = vunpack.c.l.b16 %v1307
        %v1443 = vunpack.c.l.b16 %v1308
        %v1444 = vunpack.c.l.b16 %v1309
        %v1445 = vunpack.c.l.b16 %v1310
        %v1446 = vunpack.c.l.b16 %v1311
        %v1447 = vunpack.c.l.b16 %v1312
        %v1448 = vunpack.c.l.b16 %v1313
        %v1449 = vunpack.c.l.b16 %v1314
        %v1450 = vunpack.c.l.b16 %v1315
        %v1451 = vunpack.c.l.b16 %v1316
        %v1452 = vunpack.c.l.b16 %v1317
        %v1453 = vunpack.c.l.b16 %v1318
        %v1454 = vunpack.c.l.b16 %v1319
        %v1455 = vunpack.c.l.b16 %v1320
        %v1456 = vunpack.c.l.b16 %v1321
        %v1457 = vunpack.c.l.b16 %v1322
        %v1458 = vunpack.c.l.b16 %v1323
        %v1459 = vunpack.c.l.b16 %v1324
        %v1460 = vunpack.c.l.b16 %v1325
        %v1461 = vunpack.c.l.b16 %v1326
        %v1462 = vunpack.c.l.b16 %v1327
        %v1463 = vunpack.c.l.b16 %v1328
        %v1464 = vunpack.c.l.b16 %v1329
        %v1465 = vunpack.c.l.b16 %v1330
        %v1466 = vunpack.c.l.b16 %v1331
        %v1467 = vunpack.c.l.b16 %v1332
        %v1468 = vunpack.c.l.b16 %v1333
        %v1469 = vunpack.c.l.b16 %v1334
        %v1470 = vunpack.c.l.b16 %v1335
        %v1471 = vunpack.c.l.b16 %v1336
        %v1472 = vunpack.c.l.b16 %v1337
        %v1473 = vunpack.c.l.b16 %v1338
        %v1474 = vunpack.c.l.b16 %v1339
        %v1475 = vunpack.c.l.b16 %v1340
        %v1476 = vunpack.c.l.b16 %v1341
        %v1477 = vpack.c.b16 %v1414, %v1413
        %v1478 = vpack.c.b16 %v1416, %v1415
        %v1479 = vpack.c.b16 %v1418, %v1417
        %v1480 = vpack.c.b16 %v1420, %v1419
        %v1481 = vpack.c.b16 %v1422, %v1421
        %v1482 = vpack.c.b16 %v1424, %v1423
        %v1483 = vpack.c.b16 %v1426, %v1425
        %v1484 = vpack.c.b16 %v1428, %v1427
        %v1485 = vpack.c.b16 %v1430, %v1429
        %v1486 = vpack.c.b16 %v1432, %v1431
        %v1487 = vpack.c.b16 %v1434, %v1433
        %v1488 = vpack.c.b16 %v1436, %v1435
        %v1489 = vpack.c.b16 %v1438, %v1437
        %v1490 = vpack.c.b16 %v1440, %v1439
        %v1491 = vpack.c.b16 %v1442, %v1441
        %v1492 = vpack.c.b16 %v1444, %v1443
        %v1493 = vpack.c.b16 %v1446, %v1445
        %v1494 = vpack.c.b16 %v1448, %v1447
        %v1495 = vpack.c.b16 %v1450, %v1449
        %v1496 = vpack.c.b16 %v1452, %v1451
        %v1497 = vpack.c.b16 %v1454, %v1453
        %v1498 = vpack.c.b16 %v1456, %v1455
        %v1499 = vpack.c.b16 %v1458, %v1457
        %v1500 = vpack.c.b16 %v1460, %v1459
        %v1501 = vpack.c.b16 %v1462, %v1461
        %v1502 = vpack.c.b16 %v1464, %v1463
        %v1503 = vpack.c.b16 %v1466, %v1465
        %v1504 = vpack.c.b16 %v1468, %v1467
        %v1505 = vpack.c.b16 %v1470, %v1469
        %v1506 = vpack.c.b16 %v1472, %v1471
        %v1507 = vpack.c.b16 %v1474, %v1473
        %v1508 = vpack.c.b16 %v1476, %v1475
        %1541 = vmatprep.subr.bf16.mxu0 0
        %1542 = vmatpush1.bf16.msra.mxu0 %v1484
        %1543 = vmatprep.subr.bf16.mxu0 0
        %1544 = vmatpush1.bf16.msra.mxu0 %v1483
        %1545 = vmatprep.subr.bf16.mxu0 0
        %1546 = vmatpush1.bf16.msra.mxu0 %v1482
        %1547 = vmatprep.subr.bf16.mxu0 0
        %1548 = vmatpush1.bf16.msra.mxu0 %v1481
        %1549 = vmatprep.subr.bf16.mxu0 0
        %1550 = vmatpush1.bf16.msra.mxu0 %v1480
        %1551 = vmatprep.subr.bf16.mxu0 0
        %1552 = vmatpush1.bf16.msra.mxu0 %v1479
        %1553 = vmatprep.subr.bf16.mxu0 0
        %1554 = vmatpush1.bf16.msra.mxu0 %v1478
        %1555 = vmatprep.subr.bf16.mxu0 0
        %1556 = vmatpush1.bf16.msra.mxu0 %v1477
        %1557 = vmatprep.subr.bf16.mxu0 0
        %1558 = vmatpush2.bf16.msra.mxu0 %v1492
        %1559 = vmatprep.subr.bf16.mxu0 0
        %1560 = vmatpush2.bf16.msra.mxu0 %v1491
        %1561 = vmatprep.subr.bf16.mxu0 0
        %1562 = vmatpush2.bf16.msra.mxu0 %v1490
        %1563 = vmatprep.subr.bf16.mxu0 0
        %1564 = vmatpush2.bf16.msra.mxu0 %v1489
        %1565 = vmatprep.subr.bf16.mxu0 0
        %1566 = vmatpush2.bf16.msra.mxu0 %v1488
        %1567 = vmatprep.subr.bf16.mxu0 0
        %1568 = vmatpush2.bf16.msra.mxu0 %v1487
        %1569 = vmatprep.subr.bf16.mxu0 0
        %1570 = vmatpush2.bf16.msra.mxu0 %v1486
        %1571 = vmatprep.subr.bf16.mxu0 0
        %1572 = vmatpush2.bf16.msra.mxu0 %v1485
        %1573 = vmatprep.mubr.bf16.mxu0 %v1275
        %1574 = vmatmul.mubr.bf16.gmra.mxu0 %v1274
        %v1575 = vpop.f32.mrf.mxu0
        %v1576 = vadd.f32 %v1347, %v1575
        %v1577 = vpop.f32.mrf.mxu0
        %v1578 = vpop.f32.mrf.mxu0
        %v1579 = vpop.f32.mrf.mxu0
        %1580 = vdwg.mxu0
        %1581 = vmatprep.subr.bf16.mxu0 0
        %1582 = vmatpush1.bf16.msra.mxu0 %v1500
        %1583 = vmatprep.subr.bf16.mxu0 0
        %1584 = vmatpush1.bf16.msra.mxu0 %v1499
        %1585 = vmatprep.subr.bf16.mxu0 0
        %1586 = vmatpush1.bf16.msra.mxu0 %v1498
        %1587 = vmatprep.subr.bf16.mxu0 0
        %1588 = vmatpush1.bf16.msra.mxu0 %v1497
        %1589 = vmatprep.subr.bf16.mxu0 0
        %1590 = vmatpush1.bf16.msra.mxu0 %v1496
        %1591 = vmatprep.subr.bf16.mxu0 0
        %1592 = vmatpush1.bf16.msra.mxu0 %v1495
        %1593 = vmatprep.subr.bf16.mxu0 0
        %1594 = vmatpush1.bf16.msra.mxu0 %v1494
        %1595 = vmatprep.subr.bf16.mxu0 0
        %1596 = vmatpush1.bf16.msra.mxu0 %v1493
        %1597 = vmatprep.subr.bf16.mxu0 0
        %1598 = vmatpush2.bf16.msra.mxu0 %v1508
        %1599 = vmatprep.subr.bf16.mxu0 0
        %1600 = vmatpush2.bf16.msra.mxu0 %v1507
        %1601 = vmatprep.subr.bf16.mxu0 0
        %1602 = vmatpush2.bf16.msra.mxu0 %v1506
        %1603 = vmatprep.subr.bf16.mxu0 0
        %1604 = vmatpush2.bf16.msra.mxu0 %v1505
        %1605 = vmatprep.subr.bf16.mxu0 0
        %1606 = vmatpush2.bf16.msra.mxu0 %v1504
        %1607 = vmatprep.subr.bf16.mxu0 0
        %1608 = vmatpush2.bf16.msra.mxu0 %v1503
        %1609 = vmatprep.subr.bf16.mxu0 0
        %1610 = vmatpush2.bf16.msra.mxu0 %v1502
        %1611 = vmatprep.subr.bf16.mxu0 0
        %1612 = vmatpush2.bf16.msra.mxu0 %v1501
        %1613 = vmatprep.mubr.bf16.mxu0 %v1277
        %1614 = vmatmul.mubr.bf16.gmra.mxu0 %v1276
        %v1615 = vpop.f32.mrf.mxu0
        %v1616 = vadd.f32 %v1576, %v1615
        %v1617 = vpop.f32.mrf.mxu0
        %v1618 = vpop.f32.mrf.mxu0
        %v1619 = vpop.f32.mrf.mxu0
        %1620 = vdwg.mxu0
        %v1621 = vmax.f32 %v1616, 0.0
        %v1622 = vpack.c.bf16 %v1621, %v1621
        %v1623 = vld [vmem:[%s5] sm:$0xf]
        %v1624 = vld [vmem:[%s5 + $0x4] sm:$0xf]
        %v1625 = vld [vmem:[%s5 + $0x8] sm:$0xf]
        %v1626 = vld [vmem:[%s5 + $0xc] sm:$0xf]
        %v1627 = vld [vmem:[%s5 + $0x10] sm:$0xf]
        %v1628 = vld [vmem:[%s5 + $0x14] sm:$0xf]
        %v1629 = vld [vmem:[%s5 + $0x18] sm:$0xf]
        %v1630 = vld [vmem:[%s5 + $0x1c] sm:$0xf]
        %v1631 = vld [vmem:[%s5 + $0x20] sm:$0xf]
        %v1632 = vld [vmem:[%s5 + $0x24] sm:$0xf]
        %v1633 = vld [vmem:[%s5 + $0x28] sm:$0xf]
        %v1634 = vld [vmem:[%s5 + $0x2c] sm:$0xf]
        %v1635 = vld [vmem:[%s5 + $0x30] sm:$0xf]
        %v1636 = vld [vmem:[%s5 + $0x34] sm:$0xf]
        %v1637 = vld [vmem:[%s5 + $0x38] sm:$0xf]
        %v1638 = vld [vmem:[%s5 + $0x3c] sm:$0xf]
        %v1639 = vld [vmem:[%s6] sm:$0x1]
        %v1641 = vlaneseq
        %v1642 = vshrl.u32 %v1641, 7
        %v1643 = vsub.s32 0, %v1642
        %v1644 = vrot.slane %v1639, %v1643
        %v1662 = vunpack.c.l.b16 %v1623
        %v1663 = vunpack.c.l.b16 %v1624
        %v1664 = vunpack.c.l.b16 %v1625
        %v1665 = vunpack.c.l.b16 %v1626
        %v1666 = vunpack.c.l.b16 %v1627
        %v1667 = vunpack.c.l.b16 %v1628
        %v1668 = vunpack.c.l.b16 %v1629
        %v1669 = vunpack.c.l.b16 %v1630
        %v1670 = vunpack.c.l.b16 %v1631
        %v1671 = vunpack.c.l.b16 %v1632
        %v1672 = vunpack.c.l.b16 %v1633
        %v1673 = vunpack.c.l.b16 %v1634
        %v1674 = vunpack.c.l.b16 %v1635
        %v1675 = vunpack.c.l.b16 %v1636
        %v1676 = vunpack.c.l.b16 %v1637
        %v1677 = vunpack.c.l.b16 %v1638
        %v1678 = vpack.c.b16 %v1663, %v1662
        %v1679 = vpack.c.b16 %v1665, %v1664
        %v1680 = vpack.c.b16 %v1667, %v1666
        %v1681 = vpack.c.b16 %v1669, %v1668
        %v1682 = vpack.c.b16 %v1671, %v1670
        %v1683 = vpack.c.b16 %v1673, %v1672
        %v1684 = vpack.c.b16 %v1675, %v1674
        %v1685 = vpack.c.b16 %v1677, %v1676
        %1694 = vmatprep.subr.bf16.mxu0 0
        %1695 = vmatpush1.bf16.msra.mxu0 %v1685
        %1696 = vmatprep.subr.bf16.mxu0 0
        %1697 = vmatpush1.bf16.msra.mxu0 %v1684
        %1698 = vmatprep.subr.bf16.mxu0 0
        %1699 = vmatpush1.bf16.msra.mxu0 %v1683
        %1700 = vmatprep.subr.bf16.mxu0 0
        %1701 = vmatpush1.bf16.msra.mxu0 %v1682
        %1702 = vmatprep.subr.bf16.mxu0 0
        %1703 = vmatpush1.bf16.msra.mxu0 %v1681
        %1704 = vmatprep.subr.bf16.mxu0 0
        %1705 = vmatpush1.bf16.msra.mxu0 %v1680
        %1706 = vmatprep.subr.bf16.mxu0 0
        %1707 = vmatpush1.bf16.msra.mxu0 %v1679
        %1708 = vmatprep.subr.bf16.mxu0 0
        %1709 = vmatpush1.bf16.msra.mxu0 %v1678
        %1710 = vmatprep.subr.bf16.mxu0 0
        %1711 = vmatpush2.bf16.msra.mxu0 0
        %1712 = vmatprep.subr.bf16.mxu0 0
        %1713 = vmatpush2.bf16.msra.mxu0 0
        %1714 = vmatprep.subr.bf16.mxu0 0
        %1715 = vmatpush2.bf16.msra.mxu0 0
        %1716 = vmatprep.subr.bf16.mxu0 0
        %1717 = vmatpush2.bf16.msra.mxu0 0
        %1718 = vmatprep.subr.bf16.mxu0 0
        %1719 = vmatpush2.bf16.msra.mxu0 0
        %1720 = vmatprep.subr.bf16.mxu0 0
        %1721 = vmatpush2.bf16.msra.mxu0 0
        %1722 = vmatprep.subr.bf16.mxu0 0
        %1723 = vmatpush2.bf16.msra.mxu0 0
        %1724 = vmatprep.subr.bf16.mxu0 0
        %1725 = vmatpush2.bf16.msra.mxu0 0
        %1726 = vmatprep.mubr.bf16.mxu0 0
        %1727 = vmatmul.mubr.bf16.gmra.mxu0 %v1622
        %v1728 = vpop.f32.mrf.mxu0
        %v1729 = vadd.f32 %v1644, %v1728
        %v1730 = vpop.f32.mrf.mxu0
        %v1731 = vpop.f32.mrf.mxu0
        %v1732 = vpop.f32.mrf.mxu0
        %1733 = vdwg.mxu0
        %vm1734 = vcmask 15360
        %1735 = vst.msk [vmem:[%s306] sm:$0xff] %vm1734, %v1729
        %p1736 = scmp.lt.s32.totalorder %s20, 1
        %s1737 = scalar_select %p1736, %s20, 1
        %s1738 = smul.addr %s1737, 8
        %s1739 = scalar_lea.vmem %s7, %s1738
        // Predicated region
        $region57: #{mlp_forward.1} parent=47 // pred_check
          %p1740 = pneg %p190
        $region58: #{mlp_forward.1} parent=47 // pred_check_branch
          %1742 = sbr.rel (%p1740) target = $region60
        $region59: #{mlp_forward.1} parent=47 // pred_region
          _
        $region60: #{mlp_forward.1} parent=47 // pred_fallthru
          _
      $region48: #{mlp_forward.1} parent=5 // pred_fallthru
        _
      %p1743 = scmp.le.s32.totalorder 2, %s15
      // Predicated region
      $region61: #{mlp_forward.1} parent=5 // pred_check
        %p1744 = pneg %p1743
      $region62: #{mlp_forward.1} parent=5 // pred_check_branch
        %1746 = sbr.rel (%p1744) target = $region64
      $region63: #{mlp_forward.1} parent=5 // pred_region
        %s1747 = ssub.s32 %s15, 2
        // Predicated region
        $region65: #{mlp_forward.1} parent=63 // pred_check
          %p1748 = pneg %p196
        $region66: #{mlp_forward.1} parent=63 // pred_check_branch
          %1750 = sbr.rel (%p1748) target = $region68
        $region67: #{mlp_forward.1} parent=63 // pred_region
          %p1751 = scmp.lt.s32.totalorder %s21, 1
          %s1752 = scalar_select %p1751, %s21, 1
          %s1753 = smul.addr %s1752, 8
          %s1754 = scalar_lea.vmem %s7, %s1753
        $region68: #{mlp_forward.1} parent=63 // pred_fallthru
          _
      $region64: #{mlp_forward.1} parent=5 // pred_fallthru
        _
    $region6: #{mlp_forward.1} parent=1 // loop_footer
      %s19 = sadd.s32 1, %s15
    $region7: #{mlp_forward.1} parent=1 // loop_footer_branch
      %14 = sbr.rel target = $region3
    $region8: #{mlp_forward.1} parent=1 // loop_exit
      _
    %1755 = vsyncpa [#allocation3], 1
    %s1756 = scalar_lea.sflag [#allocation3], 1
    %1757 = vsyncpa %s1756, 1
    %1758 = vsyncpa [#allocation5], 1

</llo_original>
